<compile_context>
chip_gen: v6e
topology: v6e:2x2x1
jax: 0.10.0
libtpu: 0.0.40
codegen_flags: <defaults>
</compile_context>

<pallas_src>
import functools

import jax
import jax.numpy as jnp
from jax.experimental import pallas as pl
from jax.experimental.pallas import tpu as pltpu


def _gated_atten_kernel(x_ref, y_ref,
                        wd_ref, bd_ref,       # drug_attention_layer    (C, C)   , (1, C)
                        wp_ref, bp_ref,       # protein_attention_layer (C, C)   , (1, C)
                        wdn_ref, bdn_ref,     # attention_layer_down    (C, C//2), (1, C//2)
                        wup_ref, bup_ref,     # attention_layer_up      (C//2, C), (1, C)
                        xo_ref, yo_ref,
                        da_ref, hsum_ref,     # scratch: (Lx, C), (Lx, C//2)
                        *, alpha, Lx, Ly, T_LY, C, matmul_dtype):
    f32 = jnp.float32
    j = pl.program_id(1)
    nj = pl.num_programs(1)

    x_blc = x_ref[0].astype(f32)      # (Lx,  C)   -- resident across the Ly loop
    y_blc = y_ref[0].astype(f32)      # (T_LY, C)  -- current Ly tile

    # Per-batch init: drug attention projection + zero the h accumulator.
    @pl.when(j == 0)
    def _():
        da_ref[...] = (jnp.dot(x_blc, wd_ref[...], preferred_element_type=f32)
                       + bd_ref[...])
        hsum_ref[...] = jnp.zeros_like(hsum_ref)

    # Protein attention projection for this Ly tile.
    pa = jnp.dot(y_blc, wp_ref[...], preferred_element_type=f32) + bp_ref[...]   # (T_LY, C)
    da = da_ref[...]                                                              # (Lx,  C)

    # Pairwise relu(d_i + p_j) for this tile only: (Lx, T_LY, C).
    s = jnp.maximum(da[:, None, :] + pa[None, :, :], 0.0)
    s2 = s.reshape(Lx * T_LY, C)

    # Down projection (dominant FLOP term).  Optionally bf16 MXU inputs,
    # f32 accumulation.
    wdn = wdn_ref[...]
    if matmul_dtype is not None:
        s2 = s2.astype(matmul_dtype)
        wdn = wdn.astype(matmul_dtype)
    h = jnp.maximum(
        jnp.dot(s2, wdn, preferred_element_type=f32) + bdn_ref[...], 0.0)        # (Lx*T_LY, C//2)
    h3 = h.reshape(Lx, T_LY, C // 2)

    # --- Protein side (mean over Lx) is complete for this tile: project + gate.
    h_y = jnp.sum(h3, axis=0) * (1.0 / Lx)                                        # (T_LY, C//2)
    prot_pre = jnp.dot(h_y, wup_ref[...], preferred_element_type=f32) + bup_ref[...]
    prot_g = jax.nn.sigmoid(prot_pre) * jnp.tanh(prot_pre)                        # (T_LY, C)
    yo_ref[0] = (y_blc * alpha + y_blc * prot_g).astype(yo_ref.dtype)

    # --- Compound side: accumulate the Ly-sum of h across tiles.
    hsum_ref[...] += jnp.sum(h3, axis=1)                                          # (Lx, C//2)

    # Finalize the compound gate on the last Ly tile.
    @pl.when(j == nj - 1)
    def _():
        comp_mean = hsum_ref[...] * (1.0 / Ly)
        comp_pre = (jnp.dot(comp_mean, wup_ref[...], preferred_element_type=f32)
                    + bup_ref[...])                                               # (Lx, C)
        comp_g = jax.nn.sigmoid(comp_pre) * jnp.tanh(comp_pre)
        xo_ref[0] = (x_blc * alpha + x_blc * comp_g).astype(xo_ref.dtype)


def _pick_ly_tile(Lx, Ly, C, budget_bytes=12 << 20):
    """Largest Ly tile whose s-tile + h-tile fit the VMEM budget.

    The tile must divide Ly exactly (so means stay exact) and, if it is a
    proper tile, be a multiple of 8 (sublane alignment of the y block).
    """
    bytes_per_row = (Lx * C + Lx * (C // 2)) * 4   # s-tile + h-tile per Ly element (f32)
    max_t = max(1, budget_bytes // max(1, bytes_per_row))
    if Ly <= max_t:
        return Ly
    t = (max_t // 8) * 8
    while t >= 8:
        if Ly % t == 0:
            return t
        t -= 8
    # No aligned divisor under budget; fall back to the full extent.
    return Ly


def _vmem_limit_bytes(Lx, T_LY, C):
    f = 4
    io = 2 * 2 * (Lx * C + T_LY * C) * f                       # in + out blocks, double-buffered
    w = 2 * (2 * C * C + 2 * C * (C // 2) + 3 * C + C // 2) * f  # weights/biases, double-buffered
    tiles = Lx * T_LY * (C + C // 2) * f                        # s tile + h tile
    scratch = Lx * (C + C // 2) * f
    est = io + w + tiles + scratch
    # Generous headroom, capped under v7x's 64 MiB physical VMEM.
    return int(min(48 << 20, max(16 << 20, 2 * est)))


def gated_atten_pallas(x, y, params, alpha=0.5, ly_tile=None, matmul_dtype=None):
    """x: (B, C, Lx), y: (B, C, Ly) -- PyTorch module convention."""
    B, C, Lx = x.shape
    _, _, Ly = y.shape
    wd, bd, wp, bp, wdn, bdn, wup, bup = params

    # Lane-dense (B, L, C) layout for the kernel; transposes live in plain XLA.
    xt = jnp.transpose(x, (0, 2, 1))          # (B, Lx, C)
    yt = jnp.transpose(y, (0, 2, 1))          # (B, Ly, C)
    # Pre-transpose weights to (in, out) so the kernel never transposes.
    wd_t, wp_t = wd.T, wp.T                   # (C, C)
    wdn_t = wdn.T                             # (C, C//2)
    wup_t = wup.T                             # (C//2, C)

    T_LY = ly_tile if ly_tile is not None else _pick_ly_tile(Lx, Ly, C)
    assert Ly % T_LY == 0, f"Ly tile {T_LY} must divide Ly={Ly}"
    NJ = Ly // T_LY

    kernel = functools.partial(
        _gated_atten_kernel, alpha=float(alpha),
        Lx=Lx, Ly=Ly, T_LY=T_LY, C=C, matmul_dtype=matmul_dtype)

    # NOTE: constant-index weight blocks still get a second (dead) buffer; with
    # large C consider pipeline_mode=pl.Buffered(1) to reclaim that VMEM.
    const = lambda shape: pl.BlockSpec(shape, lambda b, j: (0, 0))

    grid_spec = pltpu.PrefetchScalarGridSpec(
        num_scalar_prefetch=0,
        grid=(B, NJ),                          # batch parallel, Ly reduction last
        in_specs=[
            pl.BlockSpec((1, Lx, C), lambda b, j: (b, 0, 0)),
            pl.BlockSpec((1, T_LY, C), lambda b, j: (b, j, 0)),
            const((C, C)), const((1, C)),            # drug layer
            const((C, C)), const((1, C)),            # protein layer
            const((C, C // 2)), const((1, C // 2)),  # down layer
            const((C // 2, C)), const((1, C)),       # up layer
        ],
        out_specs=[
            pl.BlockSpec((1, Lx, C), lambda b, j: (b, 0, 0)),     # resident across j
            pl.BlockSpec((1, T_LY, C), lambda b, j: (b, j, 0)),   # written per Ly tile
        ],
        scratch_shapes=[
            pltpu.VMEM((Lx, C), jnp.float32),        # drug_att (per batch)
            pltpu.VMEM((Lx, C // 2), jnp.float32),   # running Ly-sum of h
        ],
    )

    xo_t, yo_t = pl.pallas_call(
        kernel,
        out_shape=(jax.ShapeDtypeStruct((B, Lx, C), x.dtype),
                   jax.ShapeDtypeStruct((B, Ly, C), y.dtype)),
        grid_spec=grid_spec,
        compiler_params=pltpu.CompilerParams(
            dimension_semantics=("parallel", "arbitrary"),
            vmem_limit_bytes=_vmem_limit_bytes(Lx, T_LY, C)),
    )(xt, yt, wd_t, bd, wp_t, bp, wdn_t, bdn, wup_t, bup)

    return jnp.transpose(xo_t, (0, 2, 1)), jnp.transpose(yo_t, (0, 2, 1))


def gated_atten_ref(x, y, params, alpha=0.5):
    """Pure-JAX reference mirroring the PyTorch forward."""
    wd, bd, wp, bp, wdn, bdn, wup, bup = params
    drug_att = jnp.einsum('bcl,dc->bld', x, wd) + bd          # (B, Lx, C)
    prot_att = jnp.einsum('bcl,dc->bld', y, wp) + bp          # (B, Ly, C)
    d = drug_att[:, :, None, :]                               # (B, Lx, 1, C)
    p = prot_att[:, None, :, :]                               # (B, 1, Ly, C)
    s = jax.nn.relu(d + p)                                    # (B, Lx, Ly, C)
    h = jax.nn.relu(jnp.einsum('bijc,dc->bijd', s, wdn) + bdn)
    att = jnp.einsum('bijd,cd->bijc', h, wup) + bup           # (B, Lx, Ly, C)
    comp = jnp.mean(att, axis=2)                              # (B, Lx, C)
    prot = jnp.mean(att, axis=1)                              # (B, Ly, C)
    comp = jnp.transpose(comp, (0, 2, 1))                     # (B, C, Lx)
    prot = jnp.transpose(prot, (0, 2, 1))                     # (B, C, Ly)
    comp_g = jax.nn.sigmoid(comp) * jnp.tanh(comp)
    prot_g = jax.nn.sigmoid(prot) * jnp.tanh(prot)
    return x * alpha + x * comp_g, y * alpha + y * prot_g


def init_params(key, channels):
    """Deterministic nn.Linear-style init (uniform +/- 1/sqrt(fan_in))."""
    C = channels
    ks = jax.random.split(key, 8)

    def lin(kw, kb, out_f, in_f):
        bound = 1.0 / jnp.sqrt(jnp.float32(in_f))
        w = jax.random.uniform(kw, (out_f, in_f), jnp.float32, -bound, bound)
        b = jax.random.uniform(kb, (1, out_f), jnp.float32, -bound, bound)
        return w, b

    wd, bd = lin(ks[0], ks[1], C, C)            # drug_attention_layer
    wp, bp = lin(ks[2], ks[3], C, C)            # protein_attention_layer
    wdn, bdn = lin(ks[4], ks[5], C // 2, C)     # attention_layer_down
    wup, bup = lin(ks[6], ks[7], C, C // 2)     # attention_layer_up
    return (wd, bd, wp, bp, wdn, bdn, wup, bup)


if __name__ == "__main__":
    key = jax.random.PRNGKey(0)
    k_x, k_y, k_p = jax.random.split(key, 3)

    B, C, Lx, Ly = 2, 32, 16, 16
    alpha = 0.5

    x = jax.random.normal(k_x, (B, C, Lx), jnp.float32)
    y = jax.random.normal(k_y, (B, C, Ly), jnp.float32)
    params = init_params(k_p, C)

    drug_ref, prot_ref = gated_atten_ref(x, y, params, alpha=alpha)

    # 1) Default tiling (single Ly tile at these small shapes).
    drug_out, prot_out = gated_atten_pallas(x, y, params, alpha=alpha)
    jax.block_until_ready((drug_out, prot_out))
    assert jnp.allclose(drug_out, drug_ref, rtol=1e-4, atol=1e-4), "drug output mismatch"
    assert jnp.allclose(prot_out, prot_ref, rtol=1e-4, atol=1e-4), "protein output mismatch"

    # 2) Force Ly tiling to exercise the accumulator / multi-tile path.
    drug_out2, prot_out2 = gated_atten_pallas(x, y, params, alpha=alpha, ly_tile=8)
    jax.block_until_ready((drug_out2, prot_out2))
    assert jnp.allclose(drug_out2, drug_ref, rtol=1e-4, atol=1e-4), "drug output mismatch (tiled)"
    assert jnp.allclose(prot_out2, prot_ref, rtol=1e-4, atol=1e-4), "protein output mismatch (tiled)"

    print("KERNEL_OK")
</pallas_src>

<mosaic_0001>
module attributes {stable_mosaic.version = 11 : i64} {
  func.func @_gated_atten_kernel(%arg0: i32, %arg1: i32, %arg2: memref<1x16x32xf32, #tpu.memory_space<vmem>>, %arg3: memref<1x16x32xf32, #tpu.memory_space<vmem>>, %arg4: memref<32x32xf32, #tpu.memory_space<vmem>>, %arg5: memref<1x32xf32, #tpu.memory_space<vmem>>, %arg6: memref<32x32xf32, #tpu.memory_space<vmem>>, %arg7: memref<1x32xf32, #tpu.memory_space<vmem>>, %arg8: memref<32x16xf32, #tpu.memory_space<vmem>>, %arg9: memref<1x16xf32, #tpu.memory_space<vmem>>, %arg10: memref<16x32xf32, #tpu.memory_space<vmem>>, %arg11: memref<1x32xf32, #tpu.memory_space<vmem>>, %arg12: memref<1x16x32xf32, #tpu.memory_space<vmem>>, %arg13: memref<1x16x32xf32, #tpu.memory_space<vmem>>, %arg14: memref<16x32xf32, #tpu.memory_space<vmem>>, %arg15: memref<16x16xf32, #tpu.memory_space<vmem>>) attributes {dimension_semantics = [#tpu.dimension_semantics<parallel>, #tpu.dimension_semantics<arbitrary>], iteration_bounds = array<i64: 2, 1>, scalar_prefetch = 0 : i64, scratch_operands = 2 : i64, tpu.core_type = #tpu.core_type<tc>, window_params = [{transform_indices = @transform_0, window_bounds = array<i64: 1, 16, 32>}, {transform_indices = @transform_1, window_bounds = array<i64: 1, 16, 32>}, {pipeline_mode = #tpu.pipeline_mode<synchronous>, transform_indices = @transform_2, window_bounds = array<i64: 32, 32>}, {pipeline_mode = #tpu.pipeline_mode<synchronous>, transform_indices = @transform_3, window_bounds = array<i64: 1, 32>}, {pipeline_mode = #tpu.pipeline_mode<synchronous>, transform_indices = @transform_4, window_bounds = array<i64: 32, 32>}, {pipeline_mode = #tpu.pipeline_mode<synchronous>, transform_indices = @transform_5, window_bounds = array<i64: 1, 32>}, {pipeline_mode = #tpu.pipeline_mode<synchronous>, transform_indices = @transform_6, window_bounds = array<i64: 32, 16>}, {pipeline_mode = #tpu.pipeline_mode<synchronous>, transform_indices = @transform_7, window_bounds = array<i64: 1, 16>}, {pipeline_mode = #tpu.pipeline_mode<synchronous>, transform_indices = @transform_8, window_bounds = array<i64: 16, 32>}, {pipeline_mode = #tpu.pipeline_mode<synchronous>, transform_indices = @transform_9, window_bounds = array<i64: 1, 32>}, {transform_indices = @transform_10, window_bounds = array<i64: 1, 16, 32>}, {transform_indices = @transform_11, window_bounds = array<i64: 1, 16, 32>}]} {
    %c0 = arith.constant 0 : index
    %c0_0 = arith.constant 0 : index
    %c0_1 = arith.constant 0 : index
    %0 = vector.load %arg2[%c0, %c0_0, %c0_1] : memref<1x16x32xf32, #tpu.memory_space<vmem>>, vector<1x16x32xf32>
    %1 = vector.shape_cast %0 : vector<1x16x32xf32> to vector<16x32xf32>
    %c0_2 = arith.constant 0 : index
    %c0_3 = arith.constant 0 : index
    %c0_4 = arith.constant 0 : index
    %2 = vector.load %arg3[%c0_2, %c0_3, %c0_4] : memref<1x16x32xf32, #tpu.memory_space<vmem>>, vector<1x16x32xf32>
    %3 = vector.shape_cast %2 : vector<1x16x32xf32> to vector<16x32xf32>
    %c0_i32 = arith.constant 0 : i32
    %4 = arith.cmpi eq, %arg1, %c0_i32 : i32
    %5 = arith.extui %4 : i1 to i32
    %c0_i32_5 = arith.constant 0 : i32
    %6 = arith.cmpi ne, %5, %c0_i32_5 : i32
    scf.if %6 {
      %c0_38 = arith.constant 0 : index
      %c0_39 = arith.constant 0 : index
      %58 = vector.load %arg4[%c0_38, %c0_39] : memref<32x32xf32, #tpu.memory_space<vmem>>, vector<32x32xf32>
      %cst_40 = arith.constant dense<0.000000e+00> : vector<16x32xf32>
      %59 = tpu.matmul %1, %58, %cst_40 {dimension_numbers = #tpu.dot_dimension_numbers<[1], [0], [0], [1], [0, 0, 1, 1], [], []>} : vector<16x32xf32>, vector<32x32xf32>, vector<16x32xf32> -> vector<16x32xf32>
      %c0_41 = arith.constant 0 : index
      %c0_42 = arith.constant 0 : index
      %60 = vector.load %arg5[%c0_41, %c0_42] : memref<1x32xf32, #tpu.memory_space<vmem>>, vector<1x32xf32>
      %61 = vector.broadcast %60 : vector<1x32xf32> to vector<16x32xf32>
      %62 = arith.addf %59, %61 : vector<16x32xf32>
      %c0_43 = arith.constant 0 : index
      %c0_44 = arith.constant 0 : index
      %63 = vector.load %arg14[%c0_43, %c0_44] : memref<16x32xf32, #tpu.memory_space<vmem>>, vector<16x32xf32>
      tpu.vector_store %arg14[%c0_43, %c0_44], %62 {strides = array<i32>} : memref<16x32xf32, #tpu.memory_space<vmem>>, vector<16x32xf32>,
      %cst_45 = arith.constant 0.000000e+00 : f32
      %64 = vector.broadcast %cst_45 : f32 to vector<16x16xf32>
      %c0_46 = arith.constant 0 : index
      %c0_47 = arith.constant 0 : index
      %65 = vector.load %arg15[%c0_46, %c0_47] : memref<16x16xf32, #tpu.memory_space<vmem>>, vector<16x16xf32>
      tpu.vector_store %arg15[%c0_46, %c0_47], %64 {strides = array<i32>} : memref<16x16xf32, #tpu.memory_space<vmem>>, vector<16x16xf32>,
    } else {
    }
    %c0_6 = arith.constant 0 : index
    %c0_7 = arith.constant 0 : index
    %7 = vector.load %arg6[%c0_6, %c0_7] : memref<32x32xf32, #tpu.memory_space<vmem>>, vector<32x32xf32>
    %cst = arith.constant dense<0.000000e+00> : vector<16x32xf32>
    %8 = tpu.matmul %3, %7, %cst {dimension_numbers = #tpu.dot_dimension_numbers<[1], [0], [0], [1], [0, 0, 1, 1], [], []>} : vector<16x32xf32>, vector<32x32xf32>, vector<16x32xf32> -> vector<16x32xf32>
    %c0_8 = arith.constant 0 : index
    %c0_9 = arith.constant 0 : index
    %9 = vector.load %arg7[%c0_8, %c0_9] : memref<1x32xf32, #tpu.memory_space<vmem>>, vector<1x32xf32>
    %10 = vector.broadcast %9 : vector<1x32xf32> to vector<16x32xf32>
    %11 = arith.addf %8, %10 : vector<16x32xf32>
    %c0_10 = arith.constant 0 : index
    %c0_11 = arith.constant 0 : index
    %12 = vector.load %arg14[%c0_10, %c0_11] : memref<16x32xf32, #tpu.memory_space<vmem>>, vector<16x32xf32>
    %13 = vector.shape_cast %12 : vector<16x32xf32> to vector<16x1x32xf32>
    %14 = vector.shape_cast %11 : vector<16x32xf32> to vector<1x16x32xf32>
    %15 = vector.broadcast %13 : vector<16x1x32xf32> to vector<16x16x32xf32>
    %16 = vector.broadcast %14 : vector<1x16x32xf32> to vector<16x16x32xf32>
    %17 = arith.addf %15, %16 : vector<16x16x32xf32>
    %cst_12 = arith.constant 0.000000e+00 : f32
    %18 = vector.broadcast %cst_12 : f32 to vector<16x16x32xf32>
    %19 = arith.maximumf %17, %18 : vector<16x16x32xf32>
    %20 = vector.shape_cast %19 : vector<16x16x32xf32> to vector<256x32xf32>
    %c0_13 = arith.constant 0 : index
    %c0_14 = arith.constant 0 : index
    %21 = vector.load %arg8[%c0_13, %c0_14] : memref<32x16xf32, #tpu.memory_space<vmem>>, vector<32x16xf32>
    %cst_15 = arith.constant dense<0.000000e+00> : vector<256x16xf32>
    %22 = tpu.matmul %20, %21, %cst_15 {dimension_numbers = #tpu.dot_dimension_numbers<[1], [0], [0], [1], [0, 0, 1, 1], [], []>} : vector<256x32xf32>, vector<32x16xf32>, vector<256x16xf32> -> vector<256x16xf32>
    %c0_16 = arith.constant 0 : index
    %c0_17 = arith.constant 0 : index
    %23 = vector.load %arg9[%c0_16, %c0_17] : memref<1x16xf32, #tpu.memory_space<vmem>>, vector<1x16xf32>
    %24 = vector.broadcast %23 : vector<1x16xf32> to vector<256x16xf32>
    %25 = arith.addf %22, %24 : vector<256x16xf32>
    %cst_18 = arith.constant 0.000000e+00 : f32
    %26 = vector.broadcast %cst_18 : f32 to vector<256x16xf32>
    %27 = arith.maximumf %25, %26 : vector<256x16xf32>
    %28 = vector.shape_cast %27 : vector<256x16xf32> to vector<16x16x16xf32>
    %cst_19 = arith.constant dense<0.000000e+00> : vector<16x16xf32>
    %29 = vector.multi_reduction <add>, %28, %cst_19 [0] : vector<16x16x16xf32> to vector<16x16xf32>
    %cst_20 = arith.constant 6.250000e-02 : f32
    %30 = vector.broadcast %cst_20 : f32 to vector<16x16xf32>
    %31 = arith.mulf %29, %30 : vector<16x16xf32>
    %c0_21 = arith.constant 0 : index
    %c0_22 = arith.constant 0 : index
    %32 = vector.load %arg10[%c0_21, %c0_22] : memref<16x32xf32, #tpu.memory_space<vmem>>, vector<16x32xf32>
    %cst_23 = arith.constant dense<0.000000e+00> : vector<16x32xf32>
    %33 = tpu.matmul %31, %32, %cst_23 {dimension_numbers = #tpu.dot_dimension_numbers<[1], [0], [0], [1], [0, 0, 1, 1], [], []>} : vector<16x16xf32>, vector<16x32xf32>, vector<16x32xf32> -> vector<16x32xf32>
    %c0_24 = arith.constant 0 : index
    %c0_25 = arith.constant 0 : index
    %34 = vector.load %arg11[%c0_24, %c0_25] : memref<1x32xf32, #tpu.memory_space<vmem>>, vector<1x32xf32>
    %35 = vector.broadcast %34 : vector<1x32xf32> to vector<16x32xf32>
    %36 = arith.addf %33, %35 : vector<16x32xf32>
    %37 = arith.negf %36 : vector<16x32xf32>
    %38 = math.exp %37 : vector<16x32xf32>
    %cst_26 = arith.constant 1.000000e+00 : f32
    %39 = vector.broadcast %cst_26 : f32 to vector<16x32xf32>
    %40 = arith.addf %39, %38 : vector<16x32xf32>
    %41 = arith.divf %39, %40 : vector<16x32xf32>
    %42 = math.tanh %36 : vector<16x32xf32>
    %43 = arith.mulf %41, %42 : vector<16x32xf32>
    %cst_27 = arith.constant 5.000000e-01 : f32
    %44 = vector.broadcast %cst_27 : f32 to vector<16x32xf32>
    %45 = arith.mulf %3, %44 : vector<16x32xf32>
    %46 = arith.mulf %3, %43 : vector<16x32xf32>
    %47 = arith.addf %45, %46 : vector<16x32xf32>
    %c0_28 = arith.constant 0 : index
    %c0_29 = arith.constant 0 : index
    %c0_30 = arith.constant 0 : index
    %48 = vector.load %arg13[%c0_28, %c0_29, %c0_30] : memref<1x16x32xf32, #tpu.memory_space<vmem>>, vector<1x16x32xf32>
    %49 = vector.shape_cast %48 : vector<1x16x32xf32> to vector<16x32xf32>
    %50 = vector.shape_cast %47 : vector<16x32xf32> to vector<1x16x32xf32>
    tpu.vector_store %arg13[%c0_28, %c0_29, %c0_30], %50 {strides = array<i32>} : memref<1x16x32xf32, #tpu.memory_space<vmem>>, vector<1x16x32xf32>,
    %c0_31 = arith.constant 0 : index
    %c0_32 = arith.constant 0 : index
    %51 = vector.load %arg15[%c0_31, %c0_32] : memref<16x16xf32, #tpu.memory_space<vmem>>, vector<16x16xf32>
    %cst_33 = arith.constant dense<0.000000e+00> : vector<16x16xf32>
    %52 = vector.multi_reduction <add>, %28, %cst_33 [1] : vector<16x16x16xf32> to vector<16x16xf32>
    %53 = arith.addf %51, %52 : vector<16x16xf32>
    %c0_34 = arith.constant 0 : index
    %c0_35 = arith.constant 0 : index
    %54 = vector.load %arg15[%c0_34, %c0_35] : memref<16x16xf32, #tpu.memory_space<vmem>>, vector<16x16xf32>
    tpu.vector_store %arg15[%c0_34, %c0_35], %53 {strides = array<i32>} : memref<16x16xf32, #tpu.memory_space<vmem>>, vector<16x16xf32>,
    %c0_i32_36 = arith.constant 0 : i32
    %55 = arith.cmpi eq, %arg1, %c0_i32_36 : i32
    %56 = arith.extui %55 : i1 to i32
    %c0_i32_37 = arith.constant 0 : i32
    %57 = arith.cmpi ne, %56, %c0_i32_37 : i32
    scf.if %57 {
      %c0_38 = arith.constant 0 : index
      %c0_39 = arith.constant 0 : index
      %58 = vector.load %arg15[%c0_38, %c0_39] : memref<16x16xf32, #tpu.memory_space<vmem>>, vector<16x16xf32>
      %cst_40 = arith.constant 6.250000e-02 : f32
      %59 = vector.broadcast %cst_40 : f32 to vector<16x16xf32>
      %60 = arith.mulf %58, %59 : vector<16x16xf32>
      %c0_41 = arith.constant 0 : index
      %c0_42 = arith.constant 0 : index
      %61 = vector.load %arg10[%c0_41, %c0_42] : memref<16x32xf32, #tpu.memory_space<vmem>>, vector<16x32xf32>
      %cst_43 = arith.constant dense<0.000000e+00> : vector<16x32xf32>
      %62 = tpu.matmul %60, %61, %cst_43 {dimension_numbers = #tpu.dot_dimension_numbers<[1], [0], [0], [1], [0, 0, 1, 1], [], []>} : vector<16x16xf32>, vector<16x32xf32>, vector<16x32xf32> -> vector<16x32xf32>
      %c0_44 = arith.constant 0 : index
      %c0_45 = arith.constant 0 : index
      %63 = vector.load %arg11[%c0_44, %c0_45] : memref<1x32xf32, #tpu.memory_space<vmem>>, vector<1x32xf32>
      %64 = vector.broadcast %63 : vector<1x32xf32> to vector<16x32xf32>
      %65 = arith.addf %62, %64 : vector<16x32xf32>
      %66 = arith.negf %65 : vector<16x32xf32>
      %67 = math.exp %66 : vector<16x32xf32>
      %cst_46 = arith.constant 1.000000e+00 : f32
      %68 = vector.broadcast %cst_46 : f32 to vector<16x32xf32>
      %69 = arith.addf %68, %67 : vector<16x32xf32>
      %70 = arith.divf %68, %69 : vector<16x32xf32>
      %71 = math.tanh %65 : vector<16x32xf32>
      %72 = arith.mulf %70, %71 : vector<16x32xf32>
      %cst_47 = arith.constant 5.000000e-01 : f32
      %73 = vector.broadcast %cst_47 : f32 to vector<16x32xf32>
      %74 = arith.mulf %1, %73 : vector<16x32xf32>
      %75 = arith.mulf %1, %72 : vector<16x32xf32>
      %76 = arith.addf %74, %75 : vector<16x32xf32>
      %c0_48 = arith.constant 0 : index
      %c0_49 = arith.constant 0 : index
      %c0_50 = arith.constant 0 : index
      %77 = vector.load %arg12[%c0_48, %c0_49, %c0_50] : memref<1x16x32xf32, #tpu.memory_space<vmem>>, vector<1x16x32xf32>
      %78 = vector.shape_cast %77 : vector<1x16x32xf32> to vector<16x32xf32>
      %79 = vector.shape_cast %76 : vector<16x32xf32> to vector<1x16x32xf32>
      tpu.vector_store %arg12[%c0_48, %c0_49, %c0_50], %79 {strides = array<i32>} : memref<1x16x32xf32, #tpu.memory_space<vmem>>, vector<1x16x32xf32>,
    } else {
    }
    return
  }
  func.func @transform_0(%arg0: i32, %arg1: i32) -> (i32, i32, i32) {
    %c0_i32 = arith.constant 0 : i32
    %c0_i32_0 = arith.constant 0 : i32
    %c0_i32_1 = arith.constant 0 : i32
    return %arg0, %c0_i32, %c0_i32_0 : i32, i32, i32
  }
  func.func @transform_1(%arg0: i32, %arg1: i32) -> (i32, i32, i32) {
    %c0_i32 = arith.constant 0 : i32
    %c0_i32_0 = arith.constant 0 : i32
    return %arg0, %arg1, %c0_i32 : i32, i32, i32
  }
  func.func @transform_2(%arg0: i32, %arg1: i32) -> (i32, i32) {
    %c0_i32 = arith.constant 0 : i32
    %c0_i32_0 = arith.constant 0 : i32
    %c0_i32_1 = arith.constant 0 : i32
    return %c0_i32, %c0_i32_0 : i32, i32
  }
  func.func @transform_3(%arg0: i32, %arg1: i32) -> (i32, i32) {
    %c0_i32 = arith.constant 0 : i32
    %c0_i32_0 = arith.constant 0 : i32
    %c0_i32_1 = arith.constant 0 : i32
    return %c0_i32, %c0_i32_0 : i32, i32
  }
  func.func @transform_4(%arg0: i32, %arg1: i32) -> (i32, i32) {
    %c0_i32 = arith.constant 0 : i32
    %c0_i32_0 = arith.constant 0 : i32
    %c0_i32_1 = arith.constant 0 : i32
    return %c0_i32, %c0_i32_0 : i32, i32
  }
  func.func @transform_5(%arg0: i32, %arg1: i32) -> (i32, i32) {
    %c0_i32 = arith.constant 0 : i32
    %c0_i32_0 = arith.constant 0 : i32
    %c0_i32_1 = arith.constant 0 : i32
    return %c0_i32, %c0_i32_0 : i32, i32
  }
  func.func @transform_6(%arg0: i32, %arg1: i32) -> (i32, i32) {
    %c0_i32 = arith.constant 0 : i32
    %c0_i32_0 = arith.constant 0 : i32
    %c0_i32_1 = arith.constant 0 : i32
    return %c0_i32, %c0_i32_0 : i32, i32
  }
  func.func @transform_7(%arg0: i32, %arg1: i32) -> (i32, i32) {
    %c0_i32 = arith.constant 0 : i32
    %c0_i32_0 = arith.constant 0 : i32
    %c0_i32_1 = arith.constant 0 : i32
    return %c0_i32, %c0_i32_0 : i32, i32
  }
  func.func @transform_8(%arg0: i32, %arg1: i32) -> (i32, i32) {
    %c0_i32 = arith.constant 0 : i32
    %c0_i32_0 = arith.constant 0 : i32
    %c0_i32_1 = arith.constant 0 : i32
    return %c0_i32, %c0_i32_0 : i32, i32
  }
  func.func @transform_9(%arg0: i32, %arg1: i32) -> (i32, i32) {
    %c0_i32 = arith.constant 0 : i32
    %c0_i32_0 = arith.constant 0 : i32
    %c0_i32_1 = arith.constant 0 : i32
    return %c0_i32, %c0_i32_0 : i32, i32
  }
  func.func @transform_10(%arg0: i32, %arg1: i32) -> (i32, i32, i32) {
    %c0_i32 = arith.constant 0 : i32
    %c0_i32_0 = arith.constant 0 : i32
    %c0_i32_1 = arith.constant 0 : i32
    return %arg0, %c0_i32, %c0_i32_0 : i32, i32, i32
  }
  func.func @transform_11(%arg0: i32, %arg1: i32) -> (i32, i32, i32) {
    %c0_i32 = arith.constant 0 : i32
    %c0_i32_0 = arith.constant 0 : i32
    return %arg0, %arg1, %c0_i32 : i32, i32, i32
  }
}

</mosaic_0001>

<llo_original>
// kernel: tpu_custom_call.1
$region0: #{tpu_custom_call.1}
  #allocation0 [shape = 'u32[]', space=smem, size = 0x4, offset = 0x4, fixed_abs, tag = 'smem constant byte address 0x4 - core index']
  #allocation1 [shape = 'u32[144,128]{1,0:T(1,128)}', space=vmem, size = 0x12000, scoped, tag = 'internal scratch']
  #allocation2 [shape = 'f32[16,32]{1,0:T(8,128)}', space=vmem, size = 0x2000, scoped, tag = 'scratch operand']
  #allocation3 [shape = 'f32[16,16]{1,0:T(8,128)}', space=vmem, size = 0x2000, scoped, tag = 'scratch operand']
  %s0 = inlined_call_operand.vmem [shape: f32[2,16,32], index: 0, kind: input, shape index: {}]
  %s1 = inlined_call_operand.hbm [shape: f32[2,16,32], index: 1, kind: input, shape index: {}]
  %s2 = inlined_call_operand.hbm [shape: f32[32,32], index: 2, kind: input, shape index: {}]
  %s3 = inlined_call_operand.vmem [shape: f32[1,32], index: 3, kind: input, shape index: {}]
  %s4 = inlined_call_operand.hbm [shape: f32[32,32], index: 4, kind: input, shape index: {}]
  %s5 = inlined_call_operand.vmem [shape: f32[1,32], index: 5, kind: input, shape index: {}]
  %s6 = inlined_call_operand.vmem [shape: f32[32,16], index: 6, kind: input, shape index: {}]
  %s7 = inlined_call_operand.vmem [shape: f32[1,16], index: 7, kind: input, shape index: {}]
  %s8 = inlined_call_operand.vmem [shape: f32[16,32], index: 8, kind: input, shape index: {}]
  %s9 = inlined_call_operand.vmem [shape: f32[1,32], index: 9, kind: input, shape index: {}]
  %s10 = inlined_call_operand.hbm [shape: f32[2,16,32], index: 10, kind: output, shape index: {0}]
  %s11 = inlined_call_operand.hbm [shape: f32[2,16,32], index: 11, kind: output, shape index: {1}]
  %12 = xla_tuple %s10, %s11
  %s13 = sld [smem:[#allocation0]]
  $region101: #{tpu_custom_call.1} parent=0
    _
  %s15 = ssub.s32 1, %s13
  %s16 = scalar_select 0, %s15, %s13
  $region1: #{tpu_custom_call.1} parent=0
    #allocation4 [shape = 'u8[16384]{0}', space=vmem, size = 0x4000, scoped, tag = 'input window, operand 1']
    #allocation5 [shape = 's32[2]{0}', space=sflag, size = 0x8, scoped, tag = 'scoped memory for tpu_custom_call.1']
    #allocation6 [shape = 's32[2]{0}', space=sflag, size = 0x8, scoped, tag = 'scoped memory for tpu_custom_call.1']
    #allocation7 [shape = 'u8[16384]{0}', space=vmem, size = 0x4000, scoped, tag = 'input window, operand 2, single buffered']
    #allocation8 [shape = 's32[1]{0}', space=sflag, size = 0x4, scoped, tag = 'scoped memory for tpu_custom_call.1']
    #allocation9 [shape = 'u8[16384]{0}', space=vmem, size = 0x4000, scoped, tag = 'input window, operand 4, single buffered']
    #allocation10 [shape = 'u8[16384]{0}', space=vmem, size = 0x4000, scoped, tag = 'output window, operand 0']
    #allocation11 [shape = 'u8[16384]{0}', space=vmem, size = 0x4000, scoped, tag = 'output window, operand 1']
    #allocation12 [shape = 's32[2]{0}', space=sflag, size = 0x8, scoped, tag = 'scoped memory for tpu_custom_call.1']
    %17 = vsyncpa [#allocation5], 0
    %s18 = scalar_lea.sflag [#allocation5], 1
    %19 = vsyncpa %s18, 0
    %20 = vsyncpa [#allocation8], 0
    %21 = vsyncpa [#allocation6], 0
    %s22 = scalar_lea.sflag [#allocation6], 1
    %23 = vsyncpa %s22, 0
    %24 = vsyncpa [#allocation12], 0
    %s25 = scalar_lea.sflag [#allocation12], 1
    %26 = vsyncpa %s25, 0
    loop: start=0, step=1, limit=4
    $region2: #{tpu_custom_call.1} parent=1 // loop_pre_header
      _
    $region3: #{tpu_custom_call.1} parent=1 // loop_header
      %s28 = sphi 0, %s32
      %p29 = scmp.ge.s32.totalorder %s28, 4
      %s35 = sphi 0, %s47
      %s36 = sphi 0, %s43
      %s37 = sphi 0, %s35
      %s38 = sphi 0, %s36
      %s39 = sphi 0, %s37
      %s40 = sphi 0, %s38
      %s50 = sphi 0, %s52
      %s53 = sphi 0, %s50
      %s54 = sphi 0, %s53
      %s70 = sphi 0, %s54
      %s78 = sphi 0, %s80
      %s81 = sphi 0, %s78
      %s82 = sphi 0, %s81
      %s98 = sphi 0, %s82
      %s102 = sphi 0, %s102
      %s104 = sphi 0, %s102
      %s105 = sphi 0, %s104
      %s119 = sphi 0, %s105
      %s123 = sphi 0, %s123
      %s125 = sphi 0, %s123
      %s126 = sphi 0, %s125
      %s140 = sphi 0, %s126
      %s144 = sphi 0, %s144
      %s146 = sphi 0, %s144
      %s147 = sphi 0, %s146
      %s161 = sphi 0, %s147
      %s165 = sphi 0, %s165
      %s167 = sphi 0, %s165
      %s168 = sphi 0, %s167
      %s182 = sphi 0, %s168
      %s186 = sphi 0, %s186
      %s188 = sphi 0, %s186
      %s189 = sphi 0, %s188
      %s203 = sphi 0, %s189
      %s207 = sphi 0, %s207
      %s209 = sphi 0, %s207
      %s210 = sphi 0, %s209
      %s224 = sphi 0, %s210
      %s228 = sphi 0, %s228
      %s230 = sphi 0, %s228
      %s231 = sphi 0, %s230
      %s245 = sphi 0, %s231
      %s249 = sphi 0, %s249
      %s251 = sphi 0, %s249
      %s252 = sphi 0, %s251
      %s266 = sphi 0, %s252
      %s272 = sphi 0, %s274
      %s275 = sphi 0, %s272
      %s276 = sphi 0, %s275
      %s292 = sphi 0, %s276
      %s300 = sphi 0, %s302
      %s303 = sphi 0, %s300
      %s304 = sphi 0, %s303
      %s320 = sphi 0, %s304
    $region4: #{tpu_custom_call.1} parent=1 // loop_header_branch
      %31 = sbr.rel (%p29) target = $region8
    $region5: #{tpu_custom_call.1} parent=1 // loop_body
      %s33 = ssub.s32 %s28, 1
      %s34 = ssub.s32 %s28, 2
      %s41 = sadd.s32 1, %s36
      %p42 = scmp.ge.s32.totalorder %s41, 1
      %s43 = scalar_select %p42, 0, %s41
      %s44 = sadd.s32 1, %s35
      %s45 = scalar_select %p42, %s44, %s35
      %p46 = scmp.ge.s32.totalorder %s45, 2
      %s47 = scalar_select %p46, 0, %s45
      %s48 = ssub.s32 %s35, %s47
      %p49 = scmp.eq.s32.totalorder %s48, 0
      %s51 = sadd.s32 %s50, 1
      %s52 = scalar_select %p49, %s50, %s51
      %p55 = pneg %p49
      %p56 = scmp.eq.s32.totalorder %s28, 1
      %p57 = por %p55, %p56
      %p58 = scmp.ne.s32.totalorder %s50, %s53
      %p59 = scmp.eq.s32.totalorder %s28, 0
      %p60 = por %p58, %p59
      %p61 = scmp.ne.s32.totalorder %s50, %s53
      %p62 = scmp.eq.s32.totalorder %s33, 1
      %p63 = por %p61, %p62
      %p64 = scmp.ne.s32.totalorder %s53, %s54
      %p65 = scmp.eq.s32.totalorder %s33, 0
      %p66 = por %p64, %p65
      %p67 = scmp.ne.s32.totalorder %s53, %s54
      %p68 = scmp.eq.s32.totalorder %s34, 1
      %p69 = por %p67, %p68
      %p71 = scmp.ne.s32.totalorder %s54, %s70
      %p72 = scmp.eq.s32.totalorder %s34, 0
      %p73 = por %p71, %p72
      %s74 = ssub.s32 %s35, %s47
      %s75 = ssub.s32 %s36, %s43
      %s76 = sor.u32 %s74, %s75
      %p77 = scmp.eq.s32.totalorder %s76, 0
      %s79 = sadd.s32 %s78, 1
      %s80 = scalar_select %p77, %s78, %s79
      %p83 = pneg %p77
      %p84 = scmp.eq.s32.totalorder %s28, 1
      %p85 = por %p83, %p84
      %p86 = scmp.ne.s32.totalorder %s78, %s81
      %p87 = scmp.eq.s32.totalorder %s28, 0
      %p88 = por %p86, %p87
      %p89 = scmp.ne.s32.totalorder %s78, %s81
      %p90 = scmp.eq.s32.totalorder %s33, 1
      %p91 = por %p89, %p90
      %p92 = scmp.ne.s32.totalorder %s81, %s82
      %p93 = scmp.eq.s32.totalorder %s33, 0
      %p94 = por %p92, %p93
      %p95 = scmp.ne.s32.totalorder %s81, %s82
      %p96 = scmp.eq.s32.totalorder %s34, 1
      %p97 = por %p95, %p96
      %p99 = scmp.ne.s32.totalorder %s82, %s98
      %p100 = scmp.eq.s32.totalorder %s34, 0
      %p101 = por %p99, %p100
      %s103 = sadd.s32 %s102, 1
      %p106 = scmp.eq.s32.totalorder %s28, 1
      %p107 = scmp.ne.s32.totalorder %s102, %s104
      %p108 = scmp.eq.s32.totalorder %s28, 0
      %p109 = por %p107, %p108
      %p110 = scmp.ne.s32.totalorder %s102, %s104
      %p111 = scmp.eq.s32.totalorder %s33, 1
      %p112 = por %p110, %p111
      %p113 = scmp.ne.s32.totalorder %s104, %s105
      %p114 = scmp.eq.s32.totalorder %s33, 0
      %p115 = por %p113, %p114
      %p116 = scmp.ne.s32.totalorder %s104, %s105
      %p117 = scmp.eq.s32.totalorder %s34, 1
      %p118 = por %p116, %p117
      %p120 = scmp.ne.s32.totalorder %s105, %s119
      %p121 = scmp.eq.s32.totalorder %s34, 0
      %p122 = por %p120, %p121
      %s124 = sadd.s32 %s123, 1
      %p127 = scmp.eq.s32.totalorder %s28, 1
      %p128 = scmp.ne.s32.totalorder %s123, %s125
      %p129 = scmp.eq.s32.totalorder %s28, 0
      %p130 = por %p128, %p129
      %p131 = scmp.ne.s32.totalorder %s123, %s125
      %p132 = scmp.eq.s32.totalorder %s33, 1
      %p133 = por %p131, %p132
      %p134 = scmp.ne.s32.totalorder %s125, %s126
      %p135 = scmp.eq.s32.totalorder %s33, 0
      %p136 = por %p134, %p135
      %p137 = scmp.ne.s32.totalorder %s125, %s126
      %p138 = scmp.eq.s32.totalorder %s34, 1
      %p139 = por %p137, %p138
      %p141 = scmp.ne.s32.totalorder %s126, %s140
      %p142 = scmp.eq.s32.totalorder %s34, 0
      %p143 = por %p141, %p142
      %s145 = sadd.s32 %s144, 1
      %p148 = scmp.eq.s32.totalorder %s28, 1
      %p149 = scmp.ne.s32.totalorder %s144, %s146
      %p150 = scmp.eq.s32.totalorder %s28, 0
      %p151 = por %p149, %p150
      %p152 = scmp.ne.s32.totalorder %s144, %s146
      %p153 = scmp.eq.s32.totalorder %s33, 1
      %p154 = por %p152, %p153
      %p155 = scmp.ne.s32.totalorder %s146, %s147
      %p156 = scmp.eq.s32.totalorder %s33, 0
      %p157 = por %p155, %p156
      %p158 = scmp.ne.s32.totalorder %s146, %s147
      %p159 = scmp.eq.s32.totalorder %s34, 1
      %p160 = por %p158, %p159
      %p162 = scmp.ne.s32.totalorder %s147, %s161
      %p163 = scmp.eq.s32.totalorder %s34, 0
      %p164 = por %p162, %p163
      %s166 = sadd.s32 %s165, 1
      %p169 = scmp.eq.s32.totalorder %s28, 1
      %p170 = scmp.ne.s32.totalorder %s165, %s167
      %p171 = scmp.eq.s32.totalorder %s28, 0
      %p172 = por %p170, %p171
      %p173 = scmp.ne.s32.totalorder %s165, %s167
      %p174 = scmp.eq.s32.totalorder %s33, 1
      %p175 = por %p173, %p174
      %p176 = scmp.ne.s32.totalorder %s167, %s168
      %p177 = scmp.eq.s32.totalorder %s33, 0
      %p178 = por %p176, %p177
      %p179 = scmp.ne.s32.totalorder %s167, %s168
      %p180 = scmp.eq.s32.totalorder %s34, 1
      %p181 = por %p179, %p180
      %p183 = scmp.ne.s32.totalorder %s168, %s182
      %p184 = scmp.eq.s32.totalorder %s34, 0
      %p185 = por %p183, %p184
      %s187 = sadd.s32 %s186, 1
      %p190 = scmp.eq.s32.totalorder %s28, 1
      %p191 = scmp.ne.s32.totalorder %s186, %s188
      %p192 = scmp.eq.s32.totalorder %s28, 0
      %p193 = por %p191, %p192
      %p194 = scmp.ne.s32.totalorder %s186, %s188
      %p195 = scmp.eq.s32.totalorder %s33, 1
      %p196 = por %p194, %p195
      %p197 = scmp.ne.s32.totalorder %s188, %s189
      %p198 = scmp.eq.s32.totalorder %s33, 0
      %p199 = por %p197, %p198
      %p200 = scmp.ne.s32.totalorder %s188, %s189
      %p201 = scmp.eq.s32.totalorder %s34, 1
      %p202 = por %p200, %p201
      %p204 = scmp.ne.s32.totalorder %s189, %s203
      %p205 = scmp.eq.s32.totalorder %s34, 0
      %p206 = por %p204, %p205
      %s208 = sadd.s32 %s207, 1
      %p211 = scmp.eq.s32.totalorder %s28, 1
      %p212 = scmp.ne.s32.totalorder %s207, %s209
      %p213 = scmp.eq.s32.totalorder %s28, 0
      %p214 = por %p212, %p213
      %p215 = scmp.ne.s32.totalorder %s207, %s209
      %p216 = scmp.eq.s32.totalorder %s33, 1
      %p217 = por %p215, %p216
      %p218 = scmp.ne.s32.totalorder %s209, %s210
      %p219 = scmp.eq.s32.totalorder %s33, 0
      %p220 = por %p218, %p219
      %p221 = scmp.ne.s32.totalorder %s209, %s210
      %p222 = scmp.eq.s32.totalorder %s34, 1
      %p223 = por %p221, %p222
      %p225 = scmp.ne.s32.totalorder %s210, %s224
      %p226 = scmp.eq.s32.totalorder %s34, 0
      %p227 = por %p225, %p226
      %s229 = sadd.s32 %s228, 1
      %p232 = scmp.eq.s32.totalorder %s28, 1
      %p233 = scmp.ne.s32.totalorder %s228, %s230
      %p234 = scmp.eq.s32.totalorder %s28, 0
      %p235 = por %p233, %p234
      %p236 = scmp.ne.s32.totalorder %s228, %s230
      %p237 = scmp.eq.s32.totalorder %s33, 1
      %p238 = por %p236, %p237
      %p239 = scmp.ne.s32.totalorder %s230, %s231
      %p240 = scmp.eq.s32.totalorder %s33, 0
      %p241 = por %p239, %p240
      %p242 = scmp.ne.s32.totalorder %s230, %s231
      %p243 = scmp.eq.s32.totalorder %s34, 1
      %p244 = por %p242, %p243
      %p246 = scmp.ne.s32.totalorder %s231, %s245
      %p247 = scmp.eq.s32.totalorder %s34, 0
      %p248 = por %p246, %p247
      %s250 = sadd.s32 %s249, 1
      %p253 = scmp.eq.s32.totalorder %s28, 1
      %p254 = scmp.ne.s32.totalorder %s249, %s251
      %p255 = scmp.eq.s32.totalorder %s28, 0
      %p256 = por %p254, %p255
      %p257 = scmp.ne.s32.totalorder %s249, %s251
      %p258 = scmp.eq.s32.totalorder %s33, 1
      %p259 = por %p257, %p258
      %p260 = scmp.ne.s32.totalorder %s251, %s252
      %p261 = scmp.eq.s32.totalorder %s33, 0
      %p262 = por %p260, %p261
      %p263 = scmp.ne.s32.totalorder %s251, %s252
      %p264 = scmp.eq.s32.totalorder %s34, 1
      %p265 = por %p263, %p264
      %p267 = scmp.ne.s32.totalorder %s252, %s266
      %p268 = scmp.eq.s32.totalorder %s34, 0
      %p269 = por %p267, %p268
      %s270 = ssub.s32 %s35, %s47
      %p271 = scmp.eq.s32.totalorder %s270, 0
      %s273 = sadd.s32 %s272, 1
      %s274 = scalar_select %p271, %s272, %s273
      %p277 = pneg %p271
      %p278 = scmp.eq.s32.totalorder %s28, 1
      %p279 = por %p277, %p278
      %p280 = scmp.ne.s32.totalorder %s272, %s275
      %p281 = scmp.eq.s32.totalorder %s28, 0
      %p282 = por %p280, %p281
      %p283 = scmp.ne.s32.totalorder %s272, %s275
      %p284 = scmp.eq.s32.totalorder %s33, 1
      %p285 = por %p283, %p284
      %p286 = scmp.ne.s32.totalorder %s275, %s276
      %p287 = scmp.eq.s32.totalorder %s33, 0
      %p288 = por %p286, %p287
      %p289 = scmp.ne.s32.totalorder %s275, %s276
      %p290 = scmp.eq.s32.totalorder %s34, 1
      %p291 = por %p289, %p290
      %p293 = scmp.ne.s32.totalorder %s276, %s292
      %p294 = scmp.eq.s32.totalorder %s34, 0
      %p295 = por %p293, %p294
      %s296 = ssub.s32 %s35, %s47
      %s297 = ssub.s32 %s36, %s43
      %s298 = sor.u32 %s296, %s297
      %p299 = scmp.eq.s32.totalorder %s298, 0
      %s301 = sadd.s32 %s300, 1
      %s302 = scalar_select %p299, %s300, %s301
      %p305 = pneg %p299
      %p306 = scmp.eq.s32.totalorder %s28, 1
      %p307 = por %p305, %p306
      %p308 = scmp.ne.s32.totalorder %s300, %s303
      %p309 = scmp.eq.s32.totalorder %s28, 0
      %p310 = por %p308, %p309
      %p311 = scmp.ne.s32.totalorder %s300, %s303
      %p312 = scmp.eq.s32.totalorder %s33, 1
      %p313 = por %p311, %p312
      %p314 = scmp.ne.s32.totalorder %s303, %s304
      %p315 = scmp.eq.s32.totalorder %s33, 0
      %p316 = por %p314, %p315
      %p317 = scmp.ne.s32.totalorder %s303, %s304
      %p318 = scmp.eq.s32.totalorder %s34, 1
      %p319 = por %p317, %p318
      %p321 = scmp.ne.s32.totalorder %s304, %s320
      %p322 = scmp.eq.s32.totalorder %s34, 0
      %p323 = por %p321, %p322
      %p324 = scmp.le.s32.totalorder 1, %s28
      %p325 = scmp.lt.s32.totalorder %s28, 3
      %p326 = pnand %p324, %p325
      %p327 = pneg %p326
      // Predicated region
      $region9: #{tpu_custom_call.1} parent=5 // pred_check
        _
      $region10: #{tpu_custom_call.1} parent=5 // pred_check_branch
        %329 = sbr.rel (%p326) target = $region12
      $region11: #{tpu_custom_call.1} parent=5 // pred_region
        %s330 = ssub.s32 %s28, 1
        // Predicated region
        $region13: #{tpu_custom_call.1} parent=11 // pred_check
          %p331 = pneg %p115
        $region14: #{tpu_custom_call.1} parent=11 // pred_check_branch
          %333 = sbr.rel (%p331) target = $region16
        $region15: #{tpu_custom_call.1} parent=11 // pred_region
          %s335 = ssub.s32 512, 512
          %336 = vsyncadd [#allocation8], %s335
          %s337 = sshll.u32 [#allocation7], 4
          %s338 = int_to_ptr.vmem [resolvable:$true] %s337
          %343 = dma.hbm_to_vmem [thread:$0]  %s2, 512, %s338, [#allocation8], 128, 128, 8
        $region16: #{tpu_custom_call.1} parent=11 // pred_fallthru
          _
        // Predicated region
        $region17: #{tpu_custom_call.1} parent=11 // pred_check
          %p344 = pneg %p136
        $region18: #{tpu_custom_call.1} parent=11 // pred_check_branch
          %346 = sbr.rel (%p344) target = $region20
        $region19: #{tpu_custom_call.1} parent=11 // pred_region
          _
        $region20: #{tpu_custom_call.1} parent=11 // pred_fallthru
          _
        // Predicated region
        $region21: #{tpu_custom_call.1} parent=11 // pred_check
          %p347 = pneg %p157
        $region22: #{tpu_custom_call.1} parent=11 // pred_check_branch
          %349 = sbr.rel (%p347) target = $region24
        $region23: #{tpu_custom_call.1} parent=11 // pred_region
          %s351 = ssub.s32 512, 512
          %352 = vsyncadd [#allocation8], %s351
          %s353 = sshll.u32 [#allocation9], 4
          %s354 = int_to_ptr.vmem [resolvable:$true] %s353
          %359 = dma.hbm_to_vmem [thread:$0]  %s4, 512, %s354, [#allocation8], 128, 128, 8
        $region24: #{tpu_custom_call.1} parent=11 // pred_fallthru
          _
        // Predicated region
        $region25: #{tpu_custom_call.1} parent=11 // pred_check
          %p360 = pneg %p178
        $region26: #{tpu_custom_call.1} parent=11 // pred_check_branch
          %362 = sbr.rel (%p360) target = $region28
        $region27: #{tpu_custom_call.1} parent=11 // pred_region
          _
        $region28: #{tpu_custom_call.1} parent=11 // pred_fallthru
          _
        // Predicated region
        $region29: #{tpu_custom_call.1} parent=11 // pred_check
          %p363 = pneg %p199
        $region30: #{tpu_custom_call.1} parent=11 // pred_check_branch
          %365 = sbr.rel (%p363) target = $region32
        $region31: #{tpu_custom_call.1} parent=11 // pred_region
          _
        $region32: #{tpu_custom_call.1} parent=11 // pred_fallthru
          _
        // Predicated region
        $region33: #{tpu_custom_call.1} parent=11 // pred_check
          %p366 = pneg %p220
        $region34: #{tpu_custom_call.1} parent=11 // pred_check_branch
          %368 = sbr.rel (%p366) target = $region36
        $region35: #{tpu_custom_call.1} parent=11 // pred_region
          _
        $region36: #{tpu_custom_call.1} parent=11 // pred_fallthru
          _
        // Predicated region
        $region37: #{tpu_custom_call.1} parent=11 // pred_check
          %p369 = pneg %p241
        $region38: #{tpu_custom_call.1} parent=11 // pred_check_branch
          %371 = sbr.rel (%p369) target = $region40
        $region39: #{tpu_custom_call.1} parent=11 // pred_region
          _
        $region40: #{tpu_custom_call.1} parent=11 // pred_fallthru
          _
        // Predicated region
        $region41: #{tpu_custom_call.1} parent=11 // pred_check
          %p372 = pneg %p262
        $region42: #{tpu_custom_call.1} parent=11 // pred_check_branch
          %374 = sbr.rel (%p372) target = $region44
        $region43: #{tpu_custom_call.1} parent=11 // pred_region
          _
        $region44: #{tpu_custom_call.1} parent=11 // pred_fallthru
          _
      $region12: #{tpu_custom_call.1} parent=5 // pred_fallthru
        _
      %p375 = scmp.lt.s32.totalorder %s28, 2
      // Predicated region
      $region45: #{tpu_custom_call.1} parent=5 // pred_check
        %p376 = pneg %p375
      $region46: #{tpu_custom_call.1} parent=5 // pred_check_branch
        %378 = sbr.rel (%p376) target = $region48
      $region47: #{tpu_custom_call.1} parent=5 // pred_region
        // Predicated region
        $region49: #{tpu_custom_call.1} parent=47 // pred_check
          %p379 = pneg %p60
        $region50: #{tpu_custom_call.1} parent=47 // pred_check_branch
          %381 = sbr.rel (%p379) target = $region52
        $region51: #{tpu_custom_call.1} parent=47 // pred_region
          %p382 = scmp.lt.s32.totalorder %s35, 1
          %s383 = scalar_select %p382, %s35, 1
          %s384 = smul.addr %s383, 2
          %s385 = smul.addr %s384, 8
          %s386 = scalar_lea.vmem %s0, %s385
        $region52: #{tpu_custom_call.1} parent=47 // pred_fallthru
          _
        // Predicated region
        $region53: #{tpu_custom_call.1} parent=47 // pred_check
          %p387 = pneg %p88
        $region54: #{tpu_custom_call.1} parent=47 // pred_check_branch
          %389 = sbr.rel (%p387) target = $region56
        $region55: #{tpu_custom_call.1} parent=47 // pred_region
          %s390 = sand.u32 %s78, 1
          %s391 = scalar_lea.sflag [#allocation5], %s390
          %s392 = sand.u32 %s78, 1
          %s393 = smul.addr %s392, 16
          %s394 = scalar_lea.vmem [#allocation4], %s393
          %s395 = smul.u32 2, %s36
          %s397 = ssub.s32 256, 256
          %398 = vsyncadd %s391, %s397
          %s399 = smul.addr %s35, 2
          %s400 = sadd.s32 %s395, %s399
          %s401 = smul.addr %s400, 128
          %s402 = scalar_lea.hbm %s1, %s401
          %s403 = sshll.u32 %s394, 4
          %s404 = int_to_ptr.vmem [resolvable:$true] %s403
          %409 = dma.hbm_to_vmem [thread:$0]  %s402, 256, %s404, %s391, 128, 128, 8
        $region56: #{tpu_custom_call.1} parent=47 // pred_fallthru
          _
      $region48: #{tpu_custom_call.1} parent=5 // pred_fallthru
        _
      %p410 = scmp.le.s32.totalorder 1, %s28
      %p411 = scmp.lt.s32.totalorder %s28, 3
      %p412 = pnand %p410, %p411
      %p413 = pneg %p412
      // Predicated region
      $region57: #{tpu_custom_call.1} parent=5 // pred_check
        _
      $region58: #{tpu_custom_call.1} parent=5 // pred_check_branch
        %415 = sbr.rel (%p412) target = $region60
      $region59: #{tpu_custom_call.1} parent=5 // pred_region
        %s416 = ssub.s32 %s28, 1
        %s417 = sand.u32 %s81, 1
        %s418 = scalar_lea.sflag [#allocation5], %s417
        %s419 = sand.u32 %s81, 1
        %s420 = smul.addr %s419, 16
        %s421 = scalar_lea.vmem [#allocation4], %s420
        // Predicated region
        $region61: #{tpu_custom_call.1} parent=59 // pred_check
          %p422 = pneg %p94
        $region62: #{tpu_custom_call.1} parent=59 // pred_check_branch
          %424 = sbr.rel (%p422) target = $region64
        $region63: #{tpu_custom_call.1} parent=59 // pred_region
          %425 = dma.done %s418, 256
        $region64: #{tpu_custom_call.1} parent=59 // pred_fallthru
          _
        // Predicated region
        $region65: #{tpu_custom_call.1} parent=59 // pred_check
          %p426 = pneg %p115
        $region66: #{tpu_custom_call.1} parent=59 // pred_check_branch
          %428 = sbr.rel (%p426) target = $region68
        $region67: #{tpu_custom_call.1} parent=59 // pred_region
          %429 = dma.done [#allocation8], 512
        $region68: #{tpu_custom_call.1} parent=59 // pred_fallthru
          _
        // Predicated region
        $region69: #{tpu_custom_call.1} parent=59 // pred_check
          %p430 = pneg %p157
        $region70: #{tpu_custom_call.1} parent=59 // pred_check_branch
          %432 = sbr.rel (%p430) target = $region72
        $region71: #{tpu_custom_call.1} parent=59 // pred_region
          %433 = dma.done [#allocation8], 512
        $region72: #{tpu_custom_call.1} parent=59 // pred_fallthru
          _
        %p434 = scmp.lt.s32.totalorder %s37, 1
        %s435 = scalar_select %p434, %s37, 1
        %s436 = smul.addr %s435, 2
        %s437 = smul.addr %s436, 8
        %s438 = scalar_lea.vmem %s0, %s437
        %p439 = pneg %p66
        %p440 = pneg %p63
        %s441 = sand.u32 %s81, 1
        %s442 = scalar_lea.sflag [#allocation5], %s441
        %s443 = sand.u32 %s81, 1
        %s444 = smul.addr %s443, 16
        %s445 = scalar_lea.vmem [#allocation4], %s444
        %p446 = pneg %p94
        %p447 = pneg %p91
        %p448 = pneg %p115
        %p449 = pneg %p112
        %p450 = pneg %p136
        %p451 = pneg %p133
        %p452 = pneg %p157
        %p453 = pneg %p154
        %p454 = pneg %p178
        %p455 = pneg %p175
        %p456 = pneg %p199
        %p457 = pneg %p196
        %p458 = pneg %p220
        %p459 = pneg %p217
        %p460 = pneg %p241
        %p461 = pneg %p238
        %p462 = pneg %p262
        %p463 = pneg %p259
        %p464 = pneg %p288
        %p465 = pneg %p285
        %s466 = sand.u32 %s275, 1
        %s467 = scalar_lea.sflag [#allocation6], %s466
        %s468 = sand.u32 %s275, 1
        %s469 = smul.addr %s468, 16
        %s470 = scalar_lea.vmem [#allocation10], %s469
        %p471 = pneg %p316
        %p472 = pneg %p313
        %s473 = sand.u32 %s303, 1
        %s474 = scalar_lea.sflag [#allocation12], %s473
        %s475 = sand.u32 %s303, 1
        %s476 = smul.addr %s475, 16
        %s477 = scalar_lea.vmem [#allocation11], %s476
        %p478 = scmp.lt.s32.totalorder %s37, 1
        %s479 = scalar_select %p478, %s37, 1
        %s480 = smul.addr %s479, 2
        %s481 = smul.addr %s480, 8
        %s482 = scalar_lea.vmem %s0, %s481
        %s483 = smul.u32 2, %s38
        %s484 = smul.u32 2, %s38
        %v485 = vld [vmem:[%s482] sm:$0xff]
        %v486 = vld [vmem:[%s482 + $0x8] sm:$0xff]
        %v487 = vld [vmem:[%s421] sm:$0xff]
        %v488 = vld [vmem:[%s421 + $0x8] sm:$0xff]
        %p489 = scmp.eq.s32.totalorder %s38, 0
        // Predicated region
        $region73: #{tpu_custom_call.1} parent=59 // pred_check
          %p490 = pneg %p489
        $region74: #{tpu_custom_call.1} parent=59 // pred_check_branch
          %492 = sbr.rel (%p490) target = $region76
        $region75: #{tpu_custom_call.1} parent=59 // pred_region
          %v493 = vld [vmem:[#allocation7] sm:$0xff]
          %v494 = vld [vmem:[#allocation7 + $0x8] sm:$0xff]
          %v495 = vld [vmem:[#allocation7 + $0x10] sm:$0xff]
          %v496 = vld [vmem:[#allocation7 + $0x18] sm:$0xff]
          %v497 = vld [vmem:[%s3] sm:$0x1]
          %v499 = vlaneseq
          %v500 = vshrl.u32 %v499, 7
          %v501 = vsub.s32 0, %v500
          %v502 = vrot.slane %v497, %v501
          %vm504 = vcmask 261120
          %v506 = vsel %vm504, %v485, 0
          %v509 = vsel %vm504, %v486, 0
          %511 = vmatprep.subr.mxu0 0.0
          %512 = vmatpush1.msra.mxu0 0.0
          %513 = vmatprep.subr.mxu0 0.0
          %514 = vmatpush1.msra.mxu0 0.0
          %515 = vmatprep.subr.mxu0 0.0
          %516 = vmatpush1.msra.mxu0 0.0
          %517 = vmatprep.subr.mxu0 0.0
          %518 = vmatpush1.msra.mxu0 0.0
          %519 = vmatprep.subr.mxu0 0.0
          %520 = vmatpush1.msra.mxu0 0.0
          %521 = vmatprep.subr.mxu0 0.0
          %522 = vmatpush1.msra.mxu0 0.0
          %523 = vmatprep.subr.mxu0 0.0
          %524 = vmatpush1.msra.mxu0 0.0
          %525 = vmatprep.subr.mxu0 0.0
          %526 = vmatpush1.msra.mxu0 0.0
          %527 = vmatprep.subr.mxu0 0.0
          %528 = vmatpush1.msra.mxu0 0.0
          %529 = vmatprep.subr.mxu0 0.0
          %530 = vmatpush1.msra.mxu0 0.0
          %531 = vmatprep.subr.mxu0 0.0
          %532 = vmatpush1.msra.mxu0 0.0
          %533 = vmatprep.subr.mxu0 0.0
          %534 = vmatpush1.msra.mxu0 0.0
          %535 = vmatprep.subr.mxu0 0.0
          %536 = vmatpush1.msra.mxu0 %v496
          %537 = vmatprep.subr.mxu0 0.0
          %538 = vmatpush1.msra.mxu0 %v495
          %539 = vmatprep.subr.mxu0 0.0
          %540 = vmatpush1.msra.mxu0 %v494
          %541 = vmatprep.subr.mxu0 0.0
          %542 = vmatpush1.msra.mxu0 %v493
          %543 = vmatprep.subr.mxu0 0.0
          %544 = vmatpush2.msra.mxu0 0.0
          %545 = vmatprep.subr.mxu0 0.0
          %546 = vmatpush2.msra.mxu0 0.0
          %547 = vmatprep.subr.mxu0 0.0
          %548 = vmatpush2.msra.mxu0 0.0
          %549 = vmatprep.subr.mxu0 0.0
          %550 = vmatpush2.msra.mxu0 0.0
          %551 = vmatprep.subr.mxu0 0.0
          %552 = vmatpush2.msra.mxu0 0.0
          %553 = vmatprep.subr.mxu0 0.0
          %554 = vmatpush2.msra.mxu0 0.0
          %555 = vmatprep.subr.mxu0 0.0
          %556 = vmatpush2.msra.mxu0 0.0
          %557 = vmatprep.subr.mxu0 0.0
          %558 = vmatpush2.msra.mxu0 0.0
          %559 = vmatprep.subr.mxu0 0.0
          %560 = vmatpush2.msra.mxu0 0.0
          %561 = vmatprep.subr.mxu0 0.0
          %562 = vmatpush2.msra.mxu0 0.0
          %563 = vmatprep.subr.mxu0 0.0
          %564 = vmatpush2.msra.mxu0 0.0
          %565 = vmatprep.subr.mxu0 0.0
          %566 = vmatpush2.msra.mxu0 0.0
          %567 = vmatprep.subr.mxu0 0.0
          %568 = vmatpush2.msra.mxu0 0.0
          %569 = vmatprep.subr.mxu0 0.0
          %570 = vmatpush2.msra.mxu0 0.0
          %571 = vmatprep.subr.mxu0 0.0
          %572 = vmatpush2.msra.mxu0 0.0
          %573 = vmatprep.subr.mxu0 0.0
          %574 = vmatpush2.msra.mxu0 0.0
          %575 = vmatprep.mubr.f32.mxu0 0.0
          %576 = vmatmul.mubr.f32.gmra.mxu0 %v506
          %v577 = vpop.f32.mrf.mxu0
          %v578 = vadd.f32 %v502, %v577
          %v579 = vpop.f32.mrf.mxu0
          %580 = vmatprep.mubr.f32.mxu0 0.0
          %581 = vmatmul.mubr.f32.gmra.mxu0 %v509
          %v582 = vpop.f32.mrf.mxu0
          %v583 = vadd.f32 %v502, %v582
          %v584 = vpop.f32.mrf.mxu0
          %585 = vdwg.mxu0
          %586 = vst.msk [vmem:[#allocation2] sm:$0xff] %vm504, %v578
          %587 = vst.msk [vmem:[#allocation2 + $0x8] sm:$0xff] %vm504, %v583
          %vm588 = vcmask 130048
          %589 = vst.msk [vmem:[#allocation3] sm:$0xff] %vm588, 0.0
          %590 = vst.msk [vmem:[#allocation3 + $0x8] sm:$0xff] %vm588, 0.0
        $region76: #{tpu_custom_call.1} parent=59 // pred_fallthru
          _
        %v591 = vld [vmem:[#allocation9] sm:$0xff]
        %v592 = vld [vmem:[#allocation9 + $0x8] sm:$0xff]
        %v593 = vld [vmem:[#allocation9 + $0x10] sm:$0xff]
        %v594 = vld [vmem:[#allocation9 + $0x18] sm:$0xff]
        %v595 = vld [vmem:[%s5] sm:$0x1]
        %v597 = vlaneseq
        %v598 = vshrl.u32 %v597, 7
        %v599 = vsub.s32 0, %v598
        %v600 = vrot.slane %v595, %v599
        %vm602 = vcmask 261120
        %v604 = vsel %vm602, %v487, 0
        %v607 = vsel %vm602, %v488, 0
        %609 = vmatprep.subr.mxu0 0.0
        %610 = vmatpush1.msra.mxu0 0.0
        %611 = vmatprep.subr.mxu0 0.0
        %612 = vmatpush1.msra.mxu0 0.0
        %613 = vmatprep.subr.mxu0 0.0
        %614 = vmatpush1.msra.mxu0 0.0
        %615 = vmatprep.subr.mxu0 0.0
        %616 = vmatpush1.msra.mxu0 0.0
        %617 = vmatprep.subr.mxu0 0.0
        %618 = vmatpush1.msra.mxu0 0.0
        %619 = vmatprep.subr.mxu0 0.0
        %620 = vmatpush1.msra.mxu0 0.0
        %621 = vmatprep.subr.mxu0 0.0
        %622 = vmatpush1.msra.mxu0 0.0
        %623 = vmatprep.subr.mxu0 0.0
        %624 = vmatpush1.msra.mxu0 0.0
        %625 = vmatprep.subr.mxu0 0.0
        %626 = vmatpush1.msra.mxu0 0.0
        %627 = vmatprep.subr.mxu0 0.0
        %628 = vmatpush1.msra.mxu0 0.0
        %629 = vmatprep.subr.mxu0 0.0
        %630 = vmatpush1.msra.mxu0 0.0
        %631 = vmatprep.subr.mxu0 0.0
        %632 = vmatpush1.msra.mxu0 0.0
        %633 = vmatprep.subr.mxu0 0.0
        %634 = vmatpush1.msra.mxu0 %v594
        %635 = vmatprep.subr.mxu0 0.0
        %636 = vmatpush1.msra.mxu0 %v593
        %637 = vmatprep.subr.mxu0 0.0
        %638 = vmatpush1.msra.mxu0 %v592
        %639 = vmatprep.subr.mxu0 0.0
        %640 = vmatpush1.msra.mxu0 %v591
        %641 = vmatprep.subr.mxu0 0.0
        %642 = vmatpush2.msra.mxu0 0.0
        %643 = vmatprep.subr.mxu0 0.0
        %644 = vmatpush2.msra.mxu0 0.0
        %645 = vmatprep.subr.mxu0 0.0
        %646 = vmatpush2.msra.mxu0 0.0
        %647 = vmatprep.subr.mxu0 0.0
        %648 = vmatpush2.msra.mxu0 0.0
        %649 = vmatprep.subr.mxu0 0.0
        %650 = vmatpush2.msra.mxu0 0.0
        %651 = vmatprep.subr.mxu0 0.0
        %652 = vmatpush2.msra.mxu0 0.0
        %653 = vmatprep.subr.mxu0 0.0
        %654 = vmatpush2.msra.mxu0 0.0
        %655 = vmatprep.subr.mxu0 0.0
        %656 = vmatpush2.msra.mxu0 0.0
        %657 = vmatprep.subr.mxu0 0.0
        %658 = vmatpush2.msra.mxu0 0.0
        %659 = vmatprep.subr.mxu0 0.0
        %660 = vmatpush2.msra.mxu0 0.0
        %661 = vmatprep.subr.mxu0 0.0
        %662 = vmatpush2.msra.mxu0 0.0
        %663 = vmatprep.subr.mxu0 0.0
        %664 = vmatpush2.msra.mxu0 0.0
        %665 = vmatprep.subr.mxu0 0.0
        %666 = vmatpush2.msra.mxu0 0.0
        %667 = vmatprep.subr.mxu0 0.0
        %668 = vmatpush2.msra.mxu0 0.0
        %669 = vmatprep.subr.mxu0 0.0
        %670 = vmatpush2.msra.mxu0 0.0
        %671 = vmatprep.subr.mxu0 0.0
        %672 = vmatpush2.msra.mxu0 0.0
        %673 = vmatprep.mubr.f32.mxu0 0.0
        %674 = vmatmul.mubr.f32.gmra.mxu0 %v604
        %v675 = vpop.f32.mrf.mxu0
        %v676 = vadd.f32 %v600, %v675
        %v677 = vpop.f32.mrf.mxu0
        %678 = vmatprep.mubr.f32.mxu0 0.0
        %679 = vmatmul.mubr.f32.gmra.mxu0 %v607
        %v680 = vpop.f32.mrf.mxu0
        %v681 = vadd.f32 %v600, %v680
        %v682 = vpop.f32.mrf.mxu0
        %683 = vdwg.mxu0
        %v684 = vld [vmem:[#allocation2] sm:$0xff]
        %v685 = vld [vmem:[#allocation2 + $0x8] sm:$0xff]
        %v688 = vcombine.high %v684, %v684
        %v690 = vunpack.c.l.s4 1966171168
        %v691 = vunpack.c.0.s8 %v690
        %v692 = vlaneseq
        %v693 = vshrl.u32 %v692, 7
        %v694 = vsub.s32 %v691, %v693
        %v695 = vrot.slane %v684, %v694
        %v697 = vunpack.c.l.s4 1966171168
        %v698 = vunpack.c.0.s8 %v697
        %v699 = vlaneseq
        %v700 = vshrl.u32 %v699, 7
        %v701 = vsub.s32 %v698, %v700
        %v702 = vrot.slane %v688, %v701
        %v703 = vcombine.high %v695, %v695
        %v704 = vcombine.high %v702, %v702
        %v706 = vunpack.c.l.s4 1966171168
        %v707 = vunpack.c.0.s8 %v706
        %v708 = vlaneseq
        %v709 = vshrl.u32 %v708, 7
        %v710 = vsub.s32 %v707, %v709
        %v711 = vrot.slane %v695, %v710
        %v713 = vunpack.c.l.s4 1966171168
        %v714 = vunpack.c.0.s8 %v713
        %v715 = vlaneseq
        %v716 = vshrl.u32 %v715, 7
        %v717 = vsub.s32 %v714, %v716
        %v718 = vrot.slane %v702, %v717
        %v720 = vunpack.c.l.s4 1966171168
        %v721 = vunpack.c.0.s8 %v720
        %v722 = vlaneseq
        %v723 = vshrl.u32 %v722, 7
        %v724 = vsub.s32 %v721, %v723
        %v725 = vrot.slane %v703, %v724
        %v727 = vunpack.c.l.s4 1966171168
        %v728 = vunpack.c.0.s8 %v727
        %v729 = vlaneseq
        %v730 = vshrl.u32 %v729, 7
        %v731 = vsub.s32 %v728, %v730
        %v732 = vrot.slane %v704, %v731
        %v733 = vcombine.high %v711, %v711
        %v734 = vcombine.high %v718, %v718
        %v735 = vcombine.high %v725, %v725
        %v736 = vcombine.high %v732, %v732
        %v737 = vcombine.high %v685, %v685
        %v739 = vunpack.c.l.s4 1966171168
        %v740 = vunpack.c.0.s8 %v739
        %v741 = vlaneseq
        %v742 = vshrl.u32 %v741, 7
        %v743 = vsub.s32 %v740, %v742
        %v744 = vrot.slane %v685, %v743
        %v746 = vunpack.c.l.s4 1966171168
        %v747 = vunpack.c.0.s8 %v746
        %v748 = vlaneseq
        %v749 = vshrl.u32 %v748, 7
        %v750 = vsub.s32 %v747, %v749
        %v751 = vrot.slane %v737, %v750
        %v752 = vcombine.high %v744, %v744
        %v753 = vcombine.high %v751, %v751
        %v755 = vunpack.c.l.s4 1966171168
        %v756 = vunpack.c.0.s8 %v755
        %v757 = vlaneseq
        %v758 = vshrl.u32 %v757, 7
        %v759 = vsub.s32 %v756, %v758
        %v760 = vrot.slane %v744, %v759
        %v762 = vunpack.c.l.s4 1966171168
        %v763 = vunpack.c.0.s8 %v762
        %v764 = vlaneseq
        %v765 = vshrl.u32 %v764, 7
        %v766 = vsub.s32 %v763, %v765
        %v767 = vrot.slane %v751, %v766
        %v769 = vunpack.c.l.s4 1966171168
        %v770 = vunpack.c.0.s8 %v769
        %v771 = vlaneseq
        %v772 = vshrl.u32 %v771, 7
        %v773 = vsub.s32 %v770, %v772
        %v774 = vrot.slane %v752, %v773
        %v776 = vunpack.c.l.s4 1966171168
        %v777 = vunpack.c.0.s8 %v776
        %v778 = vlaneseq
        %v779 = vshrl.u32 %v778, 7
        %v780 = vsub.s32 %v777, %v779
        %v781 = vrot.slane %v753, %v780
        %v782 = vcombine.high %v760, %v760
        %v783 = vcombine.high %v767, %v767
        %v784 = vcombine.high %v774, %v774
        %v785 = vcombine.high %v781, %v781
        %v786 = vlaneseq
        %v787 = vshrl.u32 %v786, 7
        %v788 = vsub.s32 0, %v787
        %v789 = vrot.slane %v711, %v788
        %v790 = vlaneseq
        %v791 = vshrl.u32 %v790, 7
        %v792 = vsub.s32 0, %v791
        %v793 = vrot.slane %v725, %v792
        %v794 = vlaneseq
        %v795 = vshrl.u32 %v794, 7
        %v796 = vsub.s32 0, %v795
        %v797 = vrot.slane %v733, %v796
        %v798 = vlaneseq
        %v799 = vshrl.u32 %v798, 7
        %v800 = vsub.s32 0, %v799
        %v801 = vrot.slane %v735, %v800
        %v802 = vlaneseq
        %v803 = vshrl.u32 %v802, 7
        %v804 = vsub.s32 0, %v803
        %v805 = vrot.slane %v718, %v804
        %v806 = vlaneseq
        %v807 = vshrl.u32 %v806, 7
        %v808 = vsub.s32 0, %v807
        %v809 = vrot.slane %v732, %v808
        %v810 = vlaneseq
        %v811 = vshrl.u32 %v810, 7
        %v812 = vsub.s32 0, %v811
        %v813 = vrot.slane %v734, %v812
        %v814 = vlaneseq
        %v815 = vshrl.u32 %v814, 7
        %v816 = vsub.s32 0, %v815
        %v817 = vrot.slane %v736, %v816
        %v818 = vlaneseq
        %v819 = vshrl.u32 %v818, 7
        %v820 = vsub.s32 0, %v819
        %v821 = vrot.slane %v760, %v820
        %v822 = vlaneseq
        %v823 = vshrl.u32 %v822, 7
        %v824 = vsub.s32 0, %v823
        %v825 = vrot.slane %v774, %v824
        %v826 = vlaneseq
        %v827 = vshrl.u32 %v826, 7
        %v828 = vsub.s32 0, %v827
        %v829 = vrot.slane %v782, %v828
        %v830 = vlaneseq
        %v831 = vshrl.u32 %v830, 7
        %v832 = vsub.s32 0, %v831
        %v833 = vrot.slane %v784, %v832
        %v834 = vlaneseq
        %v835 = vshrl.u32 %v834, 7
        %v836 = vsub.s32 0, %v835
        %v837 = vrot.slane %v767, %v836
        %v838 = vlaneseq
        %v839 = vshrl.u32 %v838, 7
        %v840 = vsub.s32 0, %v839
        %v841 = vrot.slane %v781, %v840
        %v842 = vlaneseq
        %v843 = vshrl.u32 %v842, 7
        %v844 = vsub.s32 0, %v843
        %v845 = vrot.slane %v783, %v844
        %v846 = vlaneseq
        %v847 = vshrl.u32 %v846, 7
        %v848 = vsub.s32 0, %v847
        %v849 = vrot.slane %v785, %v848
        %v866 = vadd.f32 %v789, %v676
        %v867 = vadd.f32 %v789, %v681
        %v868 = vadd.f32 %v793, %v676
        %v869 = vadd.f32 %v793, %v681
        %v870 = vadd.f32 %v797, %v676
        %v871 = vadd.f32 %v797, %v681
        %v872 = vadd.f32 %v801, %v676
        %v873 = vadd.f32 %v801, %v681
        %v874 = vadd.f32 %v805, %v676
        %v875 = vadd.f32 %v805, %v681
        %v876 = vadd.f32 %v809, %v676
        %v877 = vadd.f32 %v809, %v681
        %v878 = vadd.f32 %v813, %v676
        %v879 = vadd.f32 %v813, %v681
        %v880 = vadd.f32 %v817, %v676
        %v881 = vadd.f32 %v817, %v681
        %v882 = vadd.f32 %v821, %v676
        %v883 = vadd.f32 %v821, %v681
        %v884 = vadd.f32 %v825, %v676
        %v885 = vadd.f32 %v825, %v681
        %v886 = vadd.f32 %v829, %v676
        %v887 = vadd.f32 %v829, %v681
        %v888 = vadd.f32 %v833, %v676
        %v889 = vadd.f32 %v833, %v681
        %v890 = vadd.f32 %v837, %v676
        %v891 = vadd.f32 %v837, %v681
        %v892 = vadd.f32 %v841, %v676
        %v893 = vadd.f32 %v841, %v681
        %v894 = vadd.f32 %v845, %v676
        %v895 = vadd.f32 %v845, %v681
        %v896 = vadd.f32 %v849, %v676
        %v897 = vadd.f32 %v849, %v681
        %v898 = vmax.f32 %v866, 0.0
        %v899 = vmax.f32 %v867, 0.0
        %v900 = vmax.f32 %v868, 0.0
        %v901 = vmax.f32 %v869, 0.0
        %v902 = vmax.f32 %v870, 0.0
        %v903 = vmax.f32 %v871, 0.0
        %v904 = vmax.f32 %v872, 0.0
        %v905 = vmax.f32 %v873, 0.0
        %v906 = vmax.f32 %v874, 0.0
        %v907 = vmax.f32 %v875, 0.0
        %v908 = vmax.f32 %v876, 0.0
        %v909 = vmax.f32 %v877, 0.0
        %v910 = vmax.f32 %v878, 0.0
        %v911 = vmax.f32 %v879, 0.0
        %v912 = vmax.f32 %v880, 0.0
        %v913 = vmax.f32 %v881, 0.0
        %v914 = vmax.f32 %v882, 0.0
        %v915 = vmax.f32 %v883, 0.0
        %v916 = vmax.f32 %v884, 0.0
        %v917 = vmax.f32 %v885, 0.0
        %v918 = vmax.f32 %v886, 0.0
        %v919 = vmax.f32 %v887, 0.0
        %v920 = vmax.f32 %v888, 0.0
        %v921 = vmax.f32 %v889, 0.0
        %v922 = vmax.f32 %v890, 0.0
        %v923 = vmax.f32 %v891, 0.0
        %v924 = vmax.f32 %v892, 0.0
        %v925 = vmax.f32 %v893, 0.0
        %v926 = vmax.f32 %v894, 0.0
        %v927 = vmax.f32 %v895, 0.0
        %v928 = vmax.f32 %v896, 0.0
        %v929 = vmax.f32 %v897, 0.0
        %v930 = vld [vmem:[%s6] sm:$0xff]
        %v931 = vld [vmem:[%s6 + $0x8] sm:$0xff]
        %v932 = vld [vmem:[%s6 + $0x10] sm:$0xff]
        %v933 = vld [vmem:[%s6 + $0x18] sm:$0xff]
        %v934 = vld [vmem:[%s7] sm:$0x1]
        %v936 = vlaneseq
        %v937 = vshrl.u32 %v936, 7
        %v938 = vsub.s32 0, %v937
        %v939 = vrot.slane %v934, %v938
        %v942 = vsel %vm602, %v898, 0
        %v945 = vsel %vm602, %v899, 0
        %v948 = vsel %vm602, %v900, 0
        %v951 = vsel %vm602, %v901, 0
        %v954 = vsel %vm602, %v902, 0
        %v957 = vsel %vm602, %v903, 0
        %v960 = vsel %vm602, %v904, 0
        %v963 = vsel %vm602, %v905, 0
        %v966 = vsel %vm602, %v906, 0
        %v969 = vsel %vm602, %v907, 0
        %v972 = vsel %vm602, %v908, 0
        %v975 = vsel %vm602, %v909, 0
        %v978 = vsel %vm602, %v910, 0
        %v981 = vsel %vm602, %v911, 0
        %v984 = vsel %vm602, %v912, 0
        %v987 = vsel %vm602, %v913, 0
        %v990 = vsel %vm602, %v914, 0
        %v993 = vsel %vm602, %v915, 0
        %v996 = vsel %vm602, %v916, 0
        %v999 = vsel %vm602, %v917, 0
        %v1002 = vsel %vm602, %v918, 0
        %v1005 = vsel %vm602, %v919, 0
        %v1008 = vsel %vm602, %v920, 0
        %v1011 = vsel %vm602, %v921, 0
        %v1014 = vsel %vm602, %v922, 0
        %v1017 = vsel %vm602, %v923, 0
        %v1020 = vsel %vm602, %v924, 0
        %v1023 = vsel %vm602, %v925, 0
        %v1026 = vsel %vm602, %v926, 0
        %v1029 = vsel %vm602, %v927, 0
        %v1032 = vsel %vm602, %v928, 0
        %v1035 = vsel %vm602, %v929, 0
        %1037 = vmatprep.subr.mxu0 0.0
        %1038 = vmatpush1.msra.mxu0 0.0
        %1039 = vmatprep.subr.mxu0 0.0
        %1040 = vmatpush1.msra.mxu0 0.0
        %1041 = vmatprep.subr.mxu0 0.0
        %1042 = vmatpush1.msra.mxu0 0.0
        %1043 = vmatprep.subr.mxu0 0.0
        %1044 = vmatpush1.msra.mxu0 0.0
        %1045 = vmatprep.subr.mxu0 0.0
        %1046 = vmatpush1.msra.mxu0 0.0
        %1047 = vmatprep.subr.mxu0 0.0
        %1048 = vmatpush1.msra.mxu0 0.0
        %1049 = vmatprep.subr.mxu0 0.0
        %1050 = vmatpush1.msra.mxu0 0.0
        %1051 = vmatprep.subr.mxu0 0.0
        %1052 = vmatpush1.msra.mxu0 0.0
        %1053 = vmatprep.subr.mxu0 0.0
        %1054 = vmatpush1.msra.mxu0 0.0
        %1055 = vmatprep.subr.mxu0 0.0
        %1056 = vmatpush1.msra.mxu0 0.0
        %1057 = vmatprep.subr.mxu0 0.0
        %1058 = vmatpush1.msra.mxu0 0.0
        %1059 = vmatprep.subr.mxu0 0.0
        %1060 = vmatpush1.msra.mxu0 0.0
        %1061 = vmatprep.subr.mxu0 0.0
        %1062 = vmatpush1.msra.mxu0 %v933
        %1063 = vmatprep.subr.mxu0 0.0
        %1064 = vmatpush1.msra.mxu0 %v932
        %1065 = vmatprep.subr.mxu0 0.0
        %1066 = vmatpush1.msra.mxu0 %v931
        %1067 = vmatprep.subr.mxu0 0.0
        %1068 = vmatpush1.msra.mxu0 %v930
        %1069 = vmatprep.subr.mxu0 0.0
        %1070 = vmatpush2.msra.mxu0 0.0
        %1071 = vmatprep.subr.mxu0 0.0
        %1072 = vmatpush2.msra.mxu0 0.0
        %1073 = vmatprep.subr.mxu0 0.0
        %1074 = vmatpush2.msra.mxu0 0.0
        %1075 = vmatprep.subr.mxu0 0.0
        %1076 = vmatpush2.msra.mxu0 0.0
        %1077 = vmatprep.subr.mxu0 0.0
        %1078 = vmatpush2.msra.mxu0 0.0
        %1079 = vmatprep.subr.mxu0 0.0
        %1080 = vmatpush2.msra.mxu0 0.0
        %1081 = vmatprep.subr.mxu0 0.0
        %1082 = vmatpush2.msra.mxu0 0.0
        %1083 = vmatprep.subr.mxu0 0.0
        %1084 = vmatpush2.msra.mxu0 0.0
        %1085 = vmatprep.subr.mxu0 0.0
        %1086 = vmatpush2.msra.mxu0 0.0
        %1087 = vmatprep.subr.mxu0 0.0
        %1088 = vmatpush2.msra.mxu0 0.0
        %1089 = vmatprep.subr.mxu0 0.0
        %1090 = vmatpush2.msra.mxu0 0.0
        %1091 = vmatprep.subr.mxu0 0.0
        %1092 = vmatpush2.msra.mxu0 0.0
        %1093 = vmatprep.subr.mxu0 0.0
        %1094 = vmatpush2.msra.mxu0 0.0
        %1095 = vmatprep.subr.mxu0 0.0
        %1096 = vmatpush2.msra.mxu0 0.0
        %1097 = vmatprep.subr.mxu0 0.0
        %1098 = vmatpush2.msra.mxu0 0.0
        %1099 = vmatprep.subr.mxu0 0.0
        %1100 = vmatpush2.msra.mxu0 0.0
        %1101 = vmatprep.mubr.f32.mxu0 0.0
        %1102 = vmatmul.mubr.f32.gmra.mxu0 %v942
        %v1103 = vpop.f32.mrf.mxu0
        %v1104 = vadd.f32 %v939, %v1103
        %v1105 = vpop.f32.mrf.mxu0
        %1106 = vmatprep.mubr.f32.mxu0 0.0
        %1107 = vmatmul.mubr.f32.gmra.mxu0 %v945
        %v1108 = vpop.f32.mrf.mxu0
        %v1109 = vadd.f32 %v939, %v1108
        %v1110 = vpop.f32.mrf.mxu0
        %1111 = vmatprep.mubr.f32.mxu0 0.0
        %1112 = vmatmul.mubr.f32.gmra.mxu0 %v948
        %v1113 = vpop.f32.mrf.mxu0
        %v1114 = vadd.f32 %v939, %v1113
        %v1115 = vpop.f32.mrf.mxu0
        %1116 = vmatprep.mubr.f32.mxu0 0.0
        %1117 = vmatmul.mubr.f32.gmra.mxu0 %v951
        %v1118 = vpop.f32.mrf.mxu0
        %v1119 = vadd.f32 %v939, %v1118
        %v1120 = vpop.f32.mrf.mxu0
        %1121 = vmatprep.mubr.f32.mxu0 0.0
        %1122 = vmatmul.mubr.f32.gmra.mxu0 %v954
        %v1123 = vpop.f32.mrf.mxu0
        %v1124 = vadd.f32 %v939, %v1123
        %v1125 = vpop.f32.mrf.mxu0
        %1126 = vmatprep.mubr.f32.mxu0 0.0
        %1127 = vmatmul.mubr.f32.gmra.mxu0 %v957
        %v1128 = vpop.f32.mrf.mxu0
        %v1129 = vadd.f32 %v939, %v1128
        %v1130 = vpop.f32.mrf.mxu0
        %1131 = vmatprep.mubr.f32.mxu0 0.0
        %1132 = vmatmul.mubr.f32.gmra.mxu0 %v960
        %v1133 = vpop.f32.mrf.mxu0
        %v1134 = vadd.f32 %v939, %v1133
        %v1135 = vpop.f32.mrf.mxu0
        %1136 = vmatprep.mubr.f32.mxu0 0.0
        %1137 = vmatmul.mubr.f32.gmra.mxu0 %v963
        %v1138 = vpop.f32.mrf.mxu0
        %v1139 = vadd.f32 %v939, %v1138
        %v1140 = vpop.f32.mrf.mxu0
        %1141 = vmatprep.mubr.f32.mxu0 0.0
        %1142 = vmatmul.mubr.f32.gmra.mxu0 %v966
        %v1143 = vpop.f32.mrf.mxu0
        %v1144 = vadd.f32 %v939, %v1143
        %v1145 = vpop.f32.mrf.mxu0
        %1146 = vmatprep.mubr.f32.mxu0 0.0
        %1147 = vmatmul.mubr.f32.gmra.mxu0 %v969
        %v1148 = vpop.f32.mrf.mxu0
        %v1149 = vadd.f32 %v939, %v1148
        %v1150 = vpop.f32.mrf.mxu0
        %1151 = vmatprep.mubr.f32.mxu0 0.0
        %1152 = vmatmul.mubr.f32.gmra.mxu0 %v972
        %v1153 = vpop.f32.mrf.mxu0
        %v1154 = vadd.f32 %v939, %v1153
        %v1155 = vpop.f32.mrf.mxu0
        %1156 = vmatprep.mubr.f32.mxu0 0.0
        %1157 = vmatmul.mubr.f32.gmra.mxu0 %v975
        %v1158 = vpop.f32.mrf.mxu0
        %v1159 = vadd.f32 %v939, %v1158
        %v1160 = vpop.f32.mrf.mxu0
        %1161 = vmatprep.mubr.f32.mxu0 0.0
        %1162 = vmatmul.mubr.f32.gmra.mxu0 %v978
        %v1163 = vpop.f32.mrf.mxu0
        %v1164 = vadd.f32 %v939, %v1163
        %v1165 = vpop.f32.mrf.mxu0
        %1166 = vmatprep.mubr.f32.mxu0 0.0
        %1167 = vmatmul.mubr.f32.gmra.mxu0 %v981
        %v1168 = vpop.f32.mrf.mxu0
        %v1169 = vadd.f32 %v939, %v1168
        %v1170 = vpop.f32.mrf.mxu0
        %1171 = vmatprep.mubr.f32.mxu0 0.0
        %1172 = vmatmul.mubr.f32.gmra.mxu0 %v984
        %v1173 = vpop.f32.mrf.mxu0
        %v1174 = vadd.f32 %v939, %v1173
        %v1175 = vpop.f32.mrf.mxu0
        %1176 = vmatprep.mubr.f32.mxu0 0.0
        %1177 = vmatmul.mubr.f32.gmra.mxu0 %v987
        %v1178 = vpop.f32.mrf.mxu0
        %v1179 = vadd.f32 %v939, %v1178
        %v1180 = vpop.f32.mrf.mxu0
        %1181 = vmatprep.mubr.f32.mxu0 0.0
        %1182 = vmatmul.mubr.f32.gmra.mxu0 %v990
        %v1183 = vpop.f32.mrf.mxu0
        %v1184 = vadd.f32 %v939, %v1183
        %v1185 = vpop.f32.mrf.mxu0
        %1186 = vmatprep.mubr.f32.mxu0 0.0
        %1187 = vmatmul.mubr.f32.gmra.mxu0 %v993
        %v1188 = vpop.f32.mrf.mxu0
        %v1189 = vadd.f32 %v939, %v1188
        %v1190 = vpop.f32.mrf.mxu0
        %1191 = vmatprep.mubr.f32.mxu0 0.0
        %1192 = vmatmul.mubr.f32.gmra.mxu0 %v996
        %v1193 = vpop.f32.mrf.mxu0
        %v1194 = vadd.f32 %v939, %v1193
        %v1195 = vpop.f32.mrf.mxu0
        %1196 = vmatprep.mubr.f32.mxu0 0.0
        %1197 = vmatmul.mubr.f32.gmra.mxu0 %v999
        %v1198 = vpop.f32.mrf.mxu0
        %v1199 = vadd.f32 %v939, %v1198
        %v1200 = vpop.f32.mrf.mxu0
        %1201 = vmatprep.mubr.f32.mxu0 0.0
        %1202 = vmatmul.mubr.f32.gmra.mxu0 %v1002
        %v1203 = vpop.f32.mrf.mxu0
        %v1204 = vadd.f32 %v939, %v1203
        %v1205 = vpop.f32.mrf.mxu0
        %1206 = vmatprep.mubr.f32.mxu0 0.0
        %1207 = vmatmul.mubr.f32.gmra.mxu0 %v1005
        %v1208 = vpop.f32.mrf.mxu0
        %v1209 = vadd.f32 %v939, %v1208
        %v1210 = vpop.f32.mrf.mxu0
        %1211 = vmatprep.mubr.f32.mxu0 0.0
        %1212 = vmatmul.mubr.f32.gmra.mxu0 %v1008
        %v1213 = vpop.f32.mrf.mxu0
        %v1214 = vadd.f32 %v939, %v1213
        %v1215 = vpop.f32.mrf.mxu0
        %1216 = vmatprep.mubr.f32.mxu0 0.0
        %1217 = vmatmul.mubr.f32.gmra.mxu0 %v1011
        %v1218 = vpop.f32.mrf.mxu0
        %v1219 = vadd.f32 %v939, %v1218
        %v1220 = vpop.f32.mrf.mxu0
        %1221 = vmatprep.mubr.f32.mxu0 0.0
        %1222 = vmatmul.mubr.f32.gmra.mxu0 %v1014
        %v1223 = vpop.f32.mrf.mxu0
        %v1224 = vadd.f32 %v939, %v1223
        %v1225 = vpop.f32.mrf.mxu0
        %1226 = vmatprep.mubr.f32.mxu0 0.0
        %1227 = vmatmul.mubr.f32.gmra.mxu0 %v1017
        %v1228 = vpop.f32.mrf.mxu0
        %v1229 = vadd.f32 %v939, %v1228
        %v1230 = vpop.f32.mrf.mxu0
        %1231 = vmatprep.mubr.f32.mxu0 0.0
        %1232 = vmatmul.mubr.f32.gmra.mxu0 %v1020
        %v1233 = vpop.f32.mrf.mxu0
        %v1234 = vadd.f32 %v939, %v1233
        %v1235 = vpop.f32.mrf.mxu0
        %1236 = vmatprep.mubr.f32.mxu0 0.0
        %1237 = vmatmul.mubr.f32.gmra.mxu0 %v1023
        %v1238 = vpop.f32.mrf.mxu0
        %v1239 = vadd.f32 %v939, %v1238
        %v1240 = vpop.f32.mrf.mxu0
        %1241 = vmatprep.mubr.f32.mxu0 0.0
        %1242 = vmatmul.mubr.f32.gmra.mxu0 %v1026
        %v1243 = vpop.f32.mrf.mxu0
        %v1244 = vadd.f32 %v939, %v1243
        %v1245 = vpop.f32.mrf.mxu0
        %1246 = vmatprep.mubr.f32.mxu0 0.0
        %1247 = vmatmul.mubr.f32.gmra.mxu0 %v1029
        %v1248 = vpop.f32.mrf.mxu0
        %v1249 = vadd.f32 %v939, %v1248
        %v1250 = vpop.f32.mrf.mxu0
        %1251 = vmatprep.mubr.f32.mxu0 0.0
        %1252 = vmatmul.mubr.f32.gmra.mxu0 %v1032
        %v1253 = vpop.f32.mrf.mxu0
        %v1254 = vadd.f32 %v939, %v1253
        %v1255 = vpop.f32.mrf.mxu0
        %1256 = vmatprep.mubr.f32.mxu0 0.0
        %1257 = vmatmul.mubr.f32.gmra.mxu0 %v1035
        %v1258 = vpop.f32.mrf.mxu0
        %v1259 = vadd.f32 %v939, %v1258
        %v1260 = vpop.f32.mrf.mxu0
        %1261 = vdwg.mxu0
        %v1262 = vmax.f32 %v1104, 0.0
        %v1263 = vmax.f32 %v1109, 0.0
        %v1264 = vmax.f32 %v1114, 0.0
        %v1265 = vmax.f32 %v1119, 0.0
        %v1266 = vmax.f32 %v1124, 0.0
        %v1267 = vmax.f32 %v1129, 0.0
        %v1268 = vmax.f32 %v1134, 0.0
        %v1269 = vmax.f32 %v1139, 0.0
        %v1270 = vmax.f32 %v1144, 0.0
        %v1271 = vmax.f32 %v1149, 0.0
        %v1272 = vmax.f32 %v1154, 0.0
        %v1273 = vmax.f32 %v1159, 0.0
        %v1274 = vmax.f32 %v1164, 0.0
        %v1275 = vmax.f32 %v1169, 0.0
        %v1276 = vmax.f32 %v1174, 0.0
        %v1277 = vmax.f32 %v1179, 0.0
        %v1278 = vmax.f32 %v1184, 0.0
        %v1279 = vmax.f32 %v1189, 0.0
        %v1280 = vmax.f32 %v1194, 0.0
        %v1281 = vmax.f32 %v1199, 0.0
        %v1282 = vmax.f32 %v1204, 0.0
        %v1283 = vmax.f32 %v1209, 0.0
        %v1284 = vmax.f32 %v1214, 0.0
        %v1285 = vmax.f32 %v1219, 0.0
        %v1286 = vmax.f32 %v1224, 0.0
        %v1287 = vmax.f32 %v1229, 0.0
        %v1288 = vmax.f32 %v1234, 0.0
        %v1289 = vmax.f32 %v1239, 0.0
        %v1290 = vmax.f32 %v1244, 0.0
        %v1291 = vmax.f32 %v1249, 0.0
        %v1292 = vmax.f32 %v1254, 0.0
        %v1293 = vmax.f32 %v1259, 0.0
        %vm1294 = vcmask 130048
        %v1295 = vsel %vm1294, %v1262, 0.0
        %v1296 = vsel %vm1294, %v1264, 0.0
        %v1297 = vadd.f32 %v1295, %v1296
        %v1298 = vsel %vm1294, %v1266, 0.0
        %v1299 = vadd.f32 %v1297, %v1298
        %v1300 = vsel %vm1294, %v1268, 0.0
        %v1301 = vadd.f32 %v1299, %v1300
        %v1302 = vsel %vm1294, %v1270, 0.0
        %v1303 = vadd.f32 %v1301, %v1302
        %v1304 = vsel %vm1294, %v1272, 0.0
        %v1305 = vadd.f32 %v1303, %v1304
        %v1306 = vsel %vm1294, %v1274, 0.0
        %v1307 = vadd.f32 %v1305, %v1306
        %v1308 = vsel %vm1294, %v1276, 0.0
        %v1309 = vadd.f32 %v1307, %v1308
        %v1310 = vsel %vm1294, %v1278, 0.0
        %v1311 = vadd.f32 %v1309, %v1310
        %v1312 = vsel %vm1294, %v1280, 0.0
        %v1313 = vadd.f32 %v1311, %v1312
        %v1314 = vsel %vm1294, %v1282, 0.0
        %v1315 = vadd.f32 %v1313, %v1314
        %v1316 = vsel %vm1294, %v1284, 0.0
        %v1317 = vadd.f32 %v1315, %v1316
        %v1318 = vsel %vm1294, %v1286, 0.0
        %v1319 = vadd.f32 %v1317, %v1318
        %v1320 = vsel %vm1294, %v1288, 0.0
        %v1321 = vadd.f32 %v1319, %v1320
        %v1322 = vsel %vm1294, %v1290, 0.0
        %v1323 = vadd.f32 %v1321, %v1322
        %v1324 = vsel %vm1294, %v1292, 0.0
        %v1325 = vadd.f32 %v1323, %v1324
        %v1326 = vsel %vm1294, %v1263, 0.0
        %v1327 = vsel %vm1294, %v1265, 0.0
        %v1328 = vadd.f32 %v1326, %v1327
        %v1329 = vsel %vm1294, %v1267, 0.0
        %v1330 = vadd.f32 %v1328, %v1329
        %v1331 = vsel %vm1294, %v1269, 0.0
        %v1332 = vadd.f32 %v1330, %v1331
        %v1333 = vsel %vm1294, %v1271, 0.0
        %v1334 = vadd.f32 %v1332, %v1333
        %v1335 = vsel %vm1294, %v1273, 0.0
        %v1336 = vadd.f32 %v1334, %v1335
        %v1337 = vsel %vm1294, %v1275, 0.0
        %v1338 = vadd.f32 %v1336, %v1337
        %v1339 = vsel %vm1294, %v1277, 0.0
        %v1340 = vadd.f32 %v1338, %v1339
        %v1341 = vsel %vm1294, %v1279, 0.0
        %v1342 = vadd.f32 %v1340, %v1341
        %v1343 = vsel %vm1294, %v1281, 0.0
        %v1344 = vadd.f32 %v1342, %v1343
        %v1345 = vsel %vm1294, %v1283, 0.0
        %v1346 = vadd.f32 %v1344, %v1345
        %v1347 = vsel %vm1294, %v1285, 0.0
        %v1348 = vadd.f32 %v1346, %v1347
        %v1349 = vsel %vm1294, %v1287, 0.0
        %v1350 = vadd.f32 %v1348, %v1349
        %v1351 = vsel %vm1294, %v1289, 0.0
        %v1352 = vadd.f32 %v1350, %v1351
        %v1353 = vsel %vm1294, %v1291, 0.0
        %v1354 = vadd.f32 %v1352, %v1353
        %v1355 = vsel %vm1294, %v1293, 0.0
        %v1356 = vadd.f32 %v1354, %v1355
        %v1357 = vmul.f32 %v1325, 0.0625
        %v1358 = vmul.f32 %v1356, 0.0625
        %v1359 = vld [vmem:[%s8] sm:$0xff]
        %v1360 = vld [vmem:[%s8 + $0x8] sm:$0xff]
        %v1361 = vld [vmem:[%s9] sm:$0x1]
        %v1363 = vlaneseq
        %v1364 = vshrl.u32 %v1363, 7
        %v1365 = vsub.s32 0, %v1364
        %v1366 = vrot.slane %v1361, %v1365
        %v1369 = vsel %vm1294, %v1357, 0
        %v1372 = vsel %vm1294, %v1358, 0
        %1374 = vmatprep.subr.mxu0 0.0
        %1375 = vmatpush1.msra.mxu0 0.0
        %1376 = vmatprep.subr.mxu0 0.0
        %1377 = vmatpush1.msra.mxu0 0.0
        %1378 = vmatprep.subr.mxu0 0.0
        %1379 = vmatpush1.msra.mxu0 0.0
        %1380 = vmatprep.subr.mxu0 0.0
        %1381 = vmatpush1.msra.mxu0 0.0
        %1382 = vmatprep.subr.mxu0 0.0
        %1383 = vmatpush1.msra.mxu0 0.0
        %1384 = vmatprep.subr.mxu0 0.0
        %1385 = vmatpush1.msra.mxu0 0.0
        %1386 = vmatprep.subr.mxu0 0.0
        %1387 = vmatpush1.msra.mxu0 0.0
        %1388 = vmatprep.subr.mxu0 0.0
        %1389 = vmatpush1.msra.mxu0 0.0
        %1390 = vmatprep.subr.mxu0 0.0
        %1391 = vmatpush1.msra.mxu0 0.0
        %1392 = vmatprep.subr.mxu0 0.0
        %1393 = vmatpush1.msra.mxu0 0.0
        %1394 = vmatprep.subr.mxu0 0.0
        %1395 = vmatpush1.msra.mxu0 0.0
        %1396 = vmatprep.subr.mxu0 0.0
        %1397 = vmatpush1.msra.mxu0 0.0
        %1398 = vmatprep.subr.mxu0 0.0
        %1399 = vmatpush1.msra.mxu0 0.0
        %1400 = vmatprep.subr.mxu0 0.0
        %1401 = vmatpush1.msra.mxu0 0.0
        %1402 = vmatprep.subr.mxu0 0.0
        %1403 = vmatpush1.msra.mxu0 %v1360
        %1404 = vmatprep.subr.mxu0 0.0
        %1405 = vmatpush1.msra.mxu0 %v1359
        %1406 = vmatprep.subr.mxu0 0.0
        %1407 = vmatpush2.msra.mxu0 0.0
        %1408 = vmatprep.subr.mxu0 0.0
        %1409 = vmatpush2.msra.mxu0 0.0
        %1410 = vmatprep.subr.mxu0 0.0
        %1411 = vmatpush2.msra.mxu0 0.0
        %1412 = vmatprep.subr.mxu0 0.0
        %1413 = vmatpush2.msra.mxu0 0.0
        %1414 = vmatprep.subr.mxu0 0.0
        %1415 = vmatpush2.msra.mxu0 0.0
        %1416 = vmatprep.subr.mxu0 0.0
        %1417 = vmatpush2.msra.mxu0 0.0
        %1418 = vmatprep.subr.mxu0 0.0
        %1419 = vmatpush2.msra.mxu0 0.0
        %1420 = vmatprep.subr.mxu0 0.0
        %1421 = vmatpush2.msra.mxu0 0.0
        %1422 = vmatprep.subr.mxu0 0.0
        %1423 = vmatpush2.msra.mxu0 0.0
        %1424 = vmatprep.subr.mxu0 0.0
        %1425 = vmatpush2.msra.mxu0 0.0
        %1426 = vmatprep.subr.mxu0 0.0
        %1427 = vmatpush2.msra.mxu0 0.0
        %1428 = vmatprep.subr.mxu0 0.0
        %1429 = vmatpush2.msra.mxu0 0.0
        %1430 = vmatprep.subr.mxu0 0.0
        %1431 = vmatpush2.msra.mxu0 0.0
        %1432 = vmatprep.subr.mxu0 0.0
        %1433 = vmatpush2.msra.mxu0 0.0
        %1434 = vmatprep.subr.mxu0 0.0
        %1435 = vmatpush2.msra.mxu0 0.0
        %1436 = vmatprep.subr.mxu0 0.0
        %1437 = vmatpush2.msra.mxu0 0.0
        %1438 = vmatprep.mubr.f32.mxu0 0.0
        %1439 = vmatmul.mubr.f32.gmra.mxu0 %v1369
        %v1440 = vpop.f32.mrf.mxu0
        %v1441 = vadd.f32 %v1366, %v1440
        %v1442 = vpop.f32.mrf.mxu0
        %1443 = vmatprep.mubr.f32.mxu0 0.0
        %1444 = vmatmul.mubr.f32.gmra.mxu0 %v1372
        %v1445 = vpop.f32.mrf.mxu0
        %v1446 = vadd.f32 %v1366, %v1445
        %v1447 = vpop.f32.mrf.mxu0
        %1448 = vdwg.mxu0
        %v1449 = vxor.u32 %v1441, 2147483648
        %v1450 = vxor.u32 %v1446, 2147483648
        %v1451 = vmul.f32 %v1449, 1.442695
        %v1452 = vpow.pop %v1451
        %v1453 = vmul.f32 %v1450, 1.442695
        %v1454 = vpow.pop %v1453
        %v1455 = vadd.f32 %v1452, 1.0
        %v1456 = vadd.f32 %v1454, 1.0
        %v1457 = vrcp.pop %v1455
        %v1458 = vmul.f32 1.0, %v1457
        %v1459 = vrcp.pop %v1456
        %v1460 = vmul.f32 1.0, %v1459
        %v1461 = vtanh.pop %v1441
        %v1462 = vtanh.pop %v1446
        %v1463 = vmul.f32 %v1458, %v1461
        %v1464 = vmul.f32 %v1460, %v1462
        %v1465 = vmul.f32 %v487, 0.5
        %v1466 = vmul.f32 %v488, 0.5
        %v1467 = vmul.f32 %v487, %v1463
        %v1468 = vmul.f32 %v488, %v1464
        %v1469 = vadd.f32 %v1465, %v1467
        %v1470 = vadd.f32 %v1466, %v1468
        %1471 = vst.msk [vmem:[%s477] sm:$0xff] %vm602, %v1469
        %1472 = vst.msk [vmem:[%s477 + $0x8] sm:$0xff] %vm602, %v1470
        %v1473 = vld [vmem:[#allocation3] sm:$0xff]
        %v1474 = vld [vmem:[#allocation3 + $0x8] sm:$0xff]
        %v1475 = vadd.f32 %v1295, %v1326
        %v1476 = vrot.slane %v1475, 4
        %v1477 = vadd.f32 %v1475, %v1476
        %v1478 = vrot.slane %v1477, 2
        %v1479 = vadd.f32 %v1477, %v1478
        %v1480 = vrot.slane %v1479, 1
        %v1481 = vadd.f32 %v1479, %v1480
        %v1482 = vadd.f32 %v1296, %v1327
        %v1483 = vrot.slane %v1482, 4
        %v1484 = vadd.f32 %v1482, %v1483
        %v1485 = vrot.slane %v1484, 2
        %v1486 = vadd.f32 %v1484, %v1485
        %v1487 = vrot.slane %v1486, 1
        %v1488 = vadd.f32 %v1486, %v1487
        %v1489 = vadd.f32 %v1298, %v1329
        %v1490 = vrot.slane %v1489, 4
        %v1491 = vadd.f32 %v1489, %v1490
        %v1492 = vrot.slane %v1491, 2
        %v1493 = vadd.f32 %v1491, %v1492
        %v1494 = vrot.slane %v1493, 1
        %v1495 = vadd.f32 %v1493, %v1494
        %v1496 = vadd.f32 %v1300, %v1331
        %v1497 = vrot.slane %v1496, 4
        %v1498 = vadd.f32 %v1496, %v1497
        %v1499 = vrot.slane %v1498, 2
        %v1500 = vadd.f32 %v1498, %v1499
        %v1501 = vrot.slane %v1500, 1
        %v1502 = vadd.f32 %v1500, %v1501
        %v1503 = vadd.f32 %v1302, %v1333
        %v1504 = vrot.slane %v1503, 4
        %v1505 = vadd.f32 %v1503, %v1504
        %v1506 = vrot.slane %v1505, 2
        %v1507 = vadd.f32 %v1505, %v1506
        %v1508 = vrot.slane %v1507, 1
        %v1509 = vadd.f32 %v1507, %v1508
        %v1510 = vadd.f32 %v1304, %v1335
        %v1511 = vrot.slane %v1510, 4
        %v1512 = vadd.f32 %v1510, %v1511
        %v1513 = vrot.slane %v1512, 2
        %v1514 = vadd.f32 %v1512, %v1513
        %v1515 = vrot.slane %v1514, 1
        %v1516 = vadd.f32 %v1514, %v1515
        %v1517 = vadd.f32 %v1306, %v1337
        %v1518 = vrot.slane %v1517, 4
        %v1519 = vadd.f32 %v1517, %v1518
        %v1520 = vrot.slane %v1519, 2
        %v1521 = vadd.f32 %v1519, %v1520
        %v1522 = vrot.slane %v1521, 1
        %v1523 = vadd.f32 %v1521, %v1522
        %v1524 = vadd.f32 %v1308, %v1339
        %v1525 = vrot.slane %v1524, 4
        %v1526 = vadd.f32 %v1524, %v1525
        %v1527 = vrot.slane %v1526, 2
        %v1528 = vadd.f32 %v1526, %v1527
        %v1529 = vrot.slane %v1528, 1
        %v1530 = vadd.f32 %v1528, %v1529
        %v1531 = vadd.f32 %v1310, %v1341
        %v1532 = vrot.slane %v1531, 4
        %v1533 = vadd.f32 %v1531, %v1532
        %v1534 = vrot.slane %v1533, 2
        %v1535 = vadd.f32 %v1533, %v1534
        %v1536 = vrot.slane %v1535, 1
        %v1537 = vadd.f32 %v1535, %v1536
        %v1538 = vadd.f32 %v1312, %v1343
        %v1539 = vrot.slane %v1538, 4
        %v1540 = vadd.f32 %v1538, %v1539
        %v1541 = vrot.slane %v1540, 2
        %v1542 = vadd.f32 %v1540, %v1541
        %v1543 = vrot.slane %v1542, 1
        %v1544 = vadd.f32 %v1542, %v1543
        %v1545 = vadd.f32 %v1314, %v1345
        %v1546 = vrot.slane %v1545, 4
        %v1547 = vadd.f32 %v1545, %v1546
        %v1548 = vrot.slane %v1547, 2
        %v1549 = vadd.f32 %v1547, %v1548
        %v1550 = vrot.slane %v1549, 1
        %v1551 = vadd.f32 %v1549, %v1550
        %v1552 = vadd.f32 %v1316, %v1347
        %v1553 = vrot.slane %v1552, 4
        %v1554 = vadd.f32 %v1552, %v1553
        %v1555 = vrot.slane %v1554, 2
        %v1556 = vadd.f32 %v1554, %v1555
        %v1557 = vrot.slane %v1556, 1
        %v1558 = vadd.f32 %v1556, %v1557
        %v1559 = vadd.f32 %v1318, %v1349
        %v1560 = vrot.slane %v1559, 4
        %v1561 = vadd.f32 %v1559, %v1560
        %v1562 = vrot.slane %v1561, 2
        %v1563 = vadd.f32 %v1561, %v1562
        %v1564 = vrot.slane %v1563, 1
        %v1565 = vadd.f32 %v1563, %v1564
        %v1566 = vadd.f32 %v1320, %v1351
        %v1567 = vrot.slane %v1566, 4
        %v1568 = vadd.f32 %v1566, %v1567
        %v1569 = vrot.slane %v1568, 2
        %v1570 = vadd.f32 %v1568, %v1569
        %v1571 = vrot.slane %v1570, 1
        %v1572 = vadd.f32 %v1570, %v1571
        %v1573 = vadd.f32 %v1322, %v1353
        %v1574 = vrot.slane %v1573, 4
        %v1575 = vadd.f32 %v1573, %v1574
        %v1576 = vrot.slane %v1575, 2
        %v1577 = vadd.f32 %v1575, %v1576
        %v1578 = vrot.slane %v1577, 1
        %v1579 = vadd.f32 %v1577, %v1578
        %v1580 = vadd.f32 %v1324, %v1355
        %v1581 = vrot.slane %v1580, 4
        %v1582 = vadd.f32 %v1580, %v1581
        %v1583 = vrot.slane %v1582, 2
        %v1584 = vadd.f32 %v1582, %v1583
        %v1585 = vrot.slane %v1584, 1
        %v1586 = vadd.f32 %v1584, %v1585
        %vm1603 = vcmask 1041409
        %v1604 = vsel %vm1603, %v1488, %v1481
        %vm1605 = vcmask 1042434
        %v1606 = vsel %vm1605, %v1495, %v1604
        %vm1607 = vcmask 1043459
        %v1608 = vsel %vm1607, %v1502, %v1606
        %vm1609 = vcmask 1044484
        %v1610 = vsel %vm1609, %v1509, %v1608
        %vm1611 = vcmask 1045509
        %v1612 = vsel %vm1611, %v1516, %v1610
        %vm1613 = vcmask 1046534
        %v1614 = vsel %vm1613, %v1523, %v1612
        %vm1615 = vcmask 1047559
        %v1616 = vsel %vm1615, %v1530, %v1614
        %v1617 = vsel %vm1603, %v1544, %v1537
        %v1618 = vsel %vm1605, %v1551, %v1617
        %v1619 = vsel %vm1607, %v1558, %v1618
        %v1620 = vsel %vm1609, %v1565, %v1619
        %v1621 = vsel %vm1611, %v1572, %v1620
        %v1622 = vsel %vm1613, %v1579, %v1621
        %v1623 = vsel %vm1615, %v1586, %v1622
        %v1626 = vadd.f32 %v1473, %v1616
        %v1627 = vadd.f32 %v1474, %v1623
        %1628 = vst.msk [vmem:[#allocation3] sm:$0xff] %vm1294, %v1626
        %1629 = vst.msk [vmem:[#allocation3 + $0x8] sm:$0xff] %vm1294, %v1627
        // Predicated region
        $region77: #{tpu_custom_call.1} parent=59 // pred_check
          %p1630 = pneg %p489
        $region78: #{tpu_custom_call.1} parent=59 // pred_check_branch
          %1632 = sbr.rel (%p1630) target = $region80
        $region79: #{tpu_custom_call.1} parent=59 // pred_region
          %v1633 = vld [vmem:[#allocation3] sm:$0xff]
          %v1634 = vld [vmem:[#allocation3 + $0x8] sm:$0xff]
          %v1635 = vmul.f32 %v1633, 0.0625
          %v1636 = vmul.f32 %v1634, 0.0625
          %v1637 = vld [vmem:[%s8] sm:$0xff]
          %v1638 = vld [vmem:[%s8 + $0x8] sm:$0xff]
          %v1639 = vld [vmem:[%s9] sm:$0x1]
          %v1641 = vlaneseq
          %v1642 = vshrl.u32 %v1641, 7
          %v1643 = vsub.s32 0, %v1642
          %v1644 = vrot.slane %v1639, %v1643
          %v1647 = vsel %vm1294, %v1635, 0
          %v1650 = vsel %vm1294, %v1636, 0
          %1652 = vmatprep.subr.mxu0 0.0
          %1653 = vmatpush1.msra.mxu0 0.0
          %1654 = vmatprep.subr.mxu0 0.0
          %1655 = vmatpush1.msra.mxu0 0.0
          %1656 = vmatprep.subr.mxu0 0.0
          %1657 = vmatpush1.msra.mxu0 0.0
          %1658 = vmatprep.subr.mxu0 0.0
          %1659 = vmatpush1.msra.mxu0 0.0
          %1660 = vmatprep.subr.mxu0 0.0
          %1661 = vmatpush1.msra.mxu0 0.0
          %1662 = vmatprep.subr.mxu0 0.0
          %1663 = vmatpush1.msra.mxu0 0.0
          %1664 = vmatprep.subr.mxu0 0.0
          %1665 = vmatpush1.msra.mxu0 0.0
          %1666 = vmatprep.subr.mxu0 0.0
          %1667 = vmatpush1.msra.mxu0 0.0
          %1668 = vmatprep.subr.mxu0 0.0
          %1669 = vmatpush1.msra.mxu0 0.0
          %1670 = vmatprep.subr.mxu0 0.0
          %1671 = vmatpush1.msra.mxu0 0.0
          %1672 = vmatprep.subr.mxu0 0.0
          %1673 = vmatpush1.msra.mxu0 0.0
          %1674 = vmatprep.subr.mxu0 0.0
          %1675 = vmatpush1.msra.mxu0 0.0
          %1676 = vmatprep.subr.mxu0 0.0
          %1677 = vmatpush1.msra.mxu0 0.0
          %1678 = vmatprep.subr.mxu0 0.0
          %1679 = vmatpush1.msra.mxu0 0.0
          %1680 = vmatprep.subr.mxu0 0.0
          %1681 = vmatpush1.msra.mxu0 %v1638
          %1682 = vmatprep.subr.mxu0 0.0
          %1683 = vmatpush1.msra.mxu0 %v1637
          %1684 = vmatprep.subr.mxu0 0.0
          %1685 = vmatpush2.msra.mxu0 0.0
          %1686 = vmatprep.subr.mxu0 0.0
          %1687 = vmatpush2.msra.mxu0 0.0
          %1688 = vmatprep.subr.mxu0 0.0
          %1689 = vmatpush2.msra.mxu0 0.0
          %1690 = vmatprep.subr.mxu0 0.0
          %1691 = vmatpush2.msra.mxu0 0.0
          %1692 = vmatprep.subr.mxu0 0.0
          %1693 = vmatpush2.msra.mxu0 0.0
          %1694 = vmatprep.subr.mxu0 0.0
          %1695 = vmatpush2.msra.mxu0 0.0
          %1696 = vmatprep.subr.mxu0 0.0
          %1697 = vmatpush2.msra.mxu0 0.0
          %1698 = vmatprep.subr.mxu0 0.0
          %1699 = vmatpush2.msra.mxu0 0.0
          %1700 = vmatprep.subr.mxu0 0.0
          %1701 = vmatpush2.msra.mxu0 0.0
          %1702 = vmatprep.subr.mxu0 0.0
          %1703 = vmatpush2.msra.mxu0 0.0
          %1704 = vmatprep.subr.mxu0 0.0
          %1705 = vmatpush2.msra.mxu0 0.0
          %1706 = vmatprep.subr.mxu0 0.0
          %1707 = vmatpush2.msra.mxu0 0.0
          %1708 = vmatprep.subr.mxu0 0.0
          %1709 = vmatpush2.msra.mxu0 0.0
          %1710 = vmatprep.subr.mxu0 0.0
          %1711 = vmatpush2.msra.mxu0 0.0
          %1712 = vmatprep.subr.mxu0 0.0
          %1713 = vmatpush2.msra.mxu0 0.0
          %1714 = vmatprep.subr.mxu0 0.0
          %1715 = vmatpush2.msra.mxu0 0.0
          %1716 = vmatprep.mubr.f32.mxu0 0.0
          %1717 = vmatmul.mubr.f32.gmra.mxu0 %v1647
          %v1718 = vpop.f32.mrf.mxu0
          %v1719 = vadd.f32 %v1644, %v1718
          %v1720 = vpop.f32.mrf.mxu0
          %1721 = vmatprep.mubr.f32.mxu0 0.0
          %1722 = vmatmul.mubr.f32.gmra.mxu0 %v1650
          %v1723 = vpop.f32.mrf.mxu0
          %v1724 = vadd.f32 %v1644, %v1723
          %v1725 = vpop.f32.mrf.mxu0
          %1726 = vdwg.mxu0
          %v1727 = vxor.u32 %v1719, 2147483648
          %v1728 = vxor.u32 %v1724, 2147483648
          %v1729 = vmul.f32 %v1727, 1.442695
          %v1730 = vpow.pop %v1729
          %v1731 = vmul.f32 %v1728, 1.442695
          %v1732 = vpow.pop %v1731
          %v1733 = vadd.f32 %v1730, 1.0
          %v1734 = vadd.f32 %v1732, 1.0
          %v1735 = vrcp.pop %v1733
          %v1736 = vmul.f32 1.0, %v1735
          %v1737 = vrcp.pop %v1734
          %v1738 = vmul.f32 1.0, %v1737
          %v1739 = vtanh.pop %v1719
          %v1740 = vtanh.pop %v1724
          %v1741 = vmul.f32 %v1736, %v1739
          %v1742 = vmul.f32 %v1738, %v1740
          %v1743 = vmul.f32 %v485, 0.5
          %v1744 = vmul.f32 %v486, 0.5
          %v1745 = vmul.f32 %v485, %v1741
          %v1746 = vmul.f32 %v486, %v1742
          %v1747 = vadd.f32 %v1743, %v1745
          %v1748 = vadd.f32 %v1744, %v1746
          %1749 = vst.msk [vmem:[%s470] sm:$0xff] %vm602, %v1747
          %1750 = vst.msk [vmem:[%s470 + $0x8] sm:$0xff] %vm602, %v1748
        $region80: #{tpu_custom_call.1} parent=59 // pred_fallthru
          _
        %s1751 = sand.u32 %s275, 1
        %s1752 = scalar_lea.sflag [#allocation6], %s1751
        %s1753 = sand.u32 %s275, 1
        %s1754 = smul.addr %s1753, 16
        %s1755 = scalar_lea.vmem [#allocation10], %s1754
        %s1756 = sand.u32 %s303, 1
        %s1757 = scalar_lea.sflag [#allocation12], %s1756
        %s1758 = sand.u32 %s303, 1
        %s1759 = smul.addr %s1758, 16
        %s1760 = scalar_lea.vmem [#allocation11], %s1759
        // Predicated region
        $region81: #{tpu_custom_call.1} parent=59 // pred_check
          %p1761 = pneg %p285
        $region82: #{tpu_custom_call.1} parent=59 // pred_check_branch
          %1763 = sbr.rel (%p1761) target = $region84
        $region83: #{tpu_custom_call.1} parent=59 // pred_region
          %s1765 = ssub.s32 256, 256
          %1766 = vsyncadd %s1752, %s1765
          %s1767 = smul.addr %s37, 2
          %s1768 = smul.addr %s1767, 128
          %s1769 = scalar_lea.hbm %s10, %s1768
          %s1770 = sshll.u32 %s1755, 4
          %s1771 = int_to_ptr.vmem [resolvable:$true] %s1770
          %1776 = dma.vmem_to_hbm [thread:$0]  %s1771, 256, %s1769, %s1752, 128, 128, 8
        $region84: #{tpu_custom_call.1} parent=59 // pred_fallthru
          _
        // Predicated region
        $region85: #{tpu_custom_call.1} parent=59 // pred_check
          %p1777 = pneg %p313
        $region86: #{tpu_custom_call.1} parent=59 // pred_check_branch
          %1779 = sbr.rel (%p1777) target = $region88
        $region87: #{tpu_custom_call.1} parent=59 // pred_region
          %s1780 = smul.u32 2, %s38
          %s1782 = ssub.s32 256, 256
          %1783 = vsyncadd %s1757, %s1782
          %s1784 = smul.addr %s37, 2
          %s1785 = sadd.s32 %s1780, %s1784
          %s1786 = smul.addr %s1785, 128
          %s1787 = scalar_lea.hbm %s11, %s1786
          %s1788 = sshll.u32 %s1760, 4
          %s1789 = int_to_ptr.vmem [resolvable:$true] %s1788
          %1794 = dma.vmem_to_hbm [thread:$0]  %s1789, 256, %s1787, %s1757, 128, 128, 8
        $region88: #{tpu_custom_call.1} parent=59 // pred_fallthru
          _
      $region60: #{tpu_custom_call.1} parent=5 // pred_fallthru
        _
      %p1795 = scmp.le.s32.totalorder 2, %s28
      // Predicated region
      $region89: #{tpu_custom_call.1} parent=5 // pred_check
        %p1796 = pneg %p1795
      $region90: #{tpu_custom_call.1} parent=5 // pred_check_branch
        %1798 = sbr.rel (%p1796) target = $region92
      $region91: #{tpu_custom_call.1} parent=5 // pred_region
        %s1799 = ssub.s32 %s28, 2
        // Predicated region
        $region93: #{tpu_custom_call.1} parent=91 // pred_check
          %p1800 = pneg %p291
        $region94: #{tpu_custom_call.1} parent=91 // pred_check_branch
          %1802 = sbr.rel (%p1800) target = $region96
        $region95: #{tpu_custom_call.1} parent=91 // pred_region
          %s1803 = sand.u32 %s276, 1
          %s1804 = scalar_lea.sflag [#allocation6], %s1803
          %s1805 = sand.u32 %s276, 1
          %s1806 = smul.addr %s1805, 16
          %s1807 = scalar_lea.vmem [#allocation10], %s1806
          %1808 = dma.done %s1804, 256
        $region96: #{tpu_custom_call.1} parent=91 // pred_fallthru
          _
        // Predicated region
        $region97: #{tpu_custom_call.1} parent=91 // pred_check
          %p1809 = pneg %p319
        $region98: #{tpu_custom_call.1} parent=91 // pred_check_branch
          %1811 = sbr.rel (%p1809) target = $region100
        $region99: #{tpu_custom_call.1} parent=91 // pred_region
          %s1812 = sand.u32 %s304, 1
          %s1813 = scalar_lea.sflag [#allocation12], %s1812
          %s1814 = sand.u32 %s304, 1
          %s1815 = smul.addr %s1814, 16
          %s1816 = scalar_lea.vmem [#allocation11], %s1815
          %1817 = dma.done %s1813, 256
        $region100: #{tpu_custom_call.1} parent=91 // pred_fallthru
          _
      $region92: #{tpu_custom_call.1} parent=5 // pred_fallthru
        _
    $region6: #{tpu_custom_call.1} parent=1 // loop_footer
      %s32 = sadd.s32 1, %s28
    $region7: #{tpu_custom_call.1} parent=1 // loop_footer_branch
      %27 = sbr.rel target = $region3
    $region8: #{tpu_custom_call.1} parent=1 // loop_exit
      _
    %1818 = vsyncpa [#allocation5], 1
    %s1819 = scalar_lea.sflag [#allocation5], 1
    %1820 = vsyncpa %s1819, 1
    %1821 = vsyncpa [#allocation8], 1
    %1822 = vsyncpa [#allocation6], 1
    %s1823 = scalar_lea.sflag [#allocation6], 1
    %1824 = vsyncpa %s1823, 1
    %1825 = vsyncpa [#allocation12], 1
    %s1826 = scalar_lea.sflag [#allocation12], 1
    %1827 = vsyncpa %s1826, 1

</llo_original>
